<compile_context>
chip_gen: v7x
topology: tpu7x:2x2x1
jax: 0.10.0
libtpu: 0.0.40
codegen_flags: <defaults>
</compile_context>

<pallas_src>
import math
import functools

import jax
import jax.numpy as jnp
import numpy as np
from jax import lax
from jax.experimental import pallas as pl
from jax.experimental.pallas import tpu as pltpu


def _bidir_attn_kernel(x_q_ref, x_full_ref, wq_ref, bq_ref, wkv_ref, bkv_ref,
                       wo_ref, bo_ref, bias_ref, o_ref,
                       k_ref, v_ref, ctx_ref, *, num_heads, head_dim, q_tile):
    """Fused QKV projection + per-head softmax attention + output projection.

    Grid: (B, NQ) — batch b outer ("parallel"), query tile qi inner ("arbitrary").

    Refs (per grid step (b, qi)):
      x_q_ref    : (1, TQ, C)   bf16 query-tile activations
      x_full_ref : (1, S, C)    bf16 full-sequence activations (read only at qi==0)
      wq_ref     : (C, C)       Wq^T, pre-scaled by 1/sqrt(hd), bf16
      bq_ref     : (1, C)       Wq bias, pre-scaled, f32
      wkv_ref    : (C, 2C)      [Wk^T | Wv^T], bf16
      bkv_ref    : (1, 2C)      [bk | bv], f32
      wo_ref     : (C, C)       Wo^T, bf16
      bo_ref     : (1, C)       Wo bias, f32
      bias_ref   : (1, 1, S)    additive key mask (0.0 keep / -1e30 masked), f32
      o_ref      : (1, TQ, C)   output tile
      k_ref      : (nh, S, hd)  bf16 scratch, K cached per batch (head-major)
      v_ref      : (nh, S, hd)  bf16 scratch, V cached per batch (head-major)
      ctx_ref    : (TQ, C)      bf16 scratch, concatenated per-head context
    """
    C = num_heads * head_dim
    S = x_full_ref.shape[1]
    qi = pl.program_id(1)

    # --- K/V projection: one full-K matmul per batch, cached head-major.
    @pl.when(qi == 0)
    def _():
        kv = jnp.dot(x_full_ref[0], wkv_ref[...],
                     preferred_element_type=jnp.float32) + bkv_ref[...]
        kv = kv.astype(jnp.bfloat16)                             # (S, 2C)
        for h in range(num_heads):                               # once per batch
            k_ref[h] = kv[:, h * head_dim:(h + 1) * head_dim]
            v_ref[h] = kv[:, C + h * head_dim:C + (h + 1) * head_dim]

    # --- Q projection for this query tile (softmax scale folded into wq/bq).
    q = jnp.dot(x_q_ref[0], wq_ref[...],
                preferred_element_type=jnp.float32) + bq_ref[...]
    q = q.astype(jnp.bfloat16)                                   # (TQ, C)

    # Broadcast the additive mask row once (outside the unrolled head loop).
    bias_b = jnp.broadcast_to(bias_ref[0], (q_tile, S))          # (TQ, S) f32

    # --- Per-head attention (nh small & static -> unrolled python loop).
    for h in range(num_heads):
        qh = q[:, h * head_dim:(h + 1) * head_dim]               # (TQ, hd) bf16
        kh = k_ref[h]                                            # (S, hd)  bf16
        vh = v_ref[h]                                            # (S, hd)  bf16

        # scores: contract last dims directly (no transpose of k).
        s = lax.dot_general(qh, kh, (((1,), (1,)), ((), ())),
                            preferred_element_type=jnp.float32)  # (TQ, S) f32
        s = s + bias_b                                           # key mask

        # numerically-stable softmax over keys (divide -> EUP reciprocal).
        m = jnp.max(s, axis=-1, keepdims=True)
        p = jnp.exp(s - m)
        l = jnp.sum(p, axis=-1, keepdims=True)
        p = (p * pl.reciprocal(l, approx=True)).astype(jnp.bfloat16)

        # Write the head's context straight into its lane slab of the bf16
        # ctx scratch (bounds live ranges; no concat of nh f32 partials).
        ctx_ref[:, h * head_dim:(h + 1) * head_dim] = jnp.dot(
            p, vh, preferred_element_type=jnp.float32).astype(jnp.bfloat16)

    # --- Output projection: single full-K MXU matmul.
    y = jnp.dot(ctx_ref[...], wo_ref[...],
                preferred_element_type=jnp.float32) + bo_ref[...]
    o_ref[0] = y.astype(o_ref.dtype)


def bidirectional_attention(x, mask, wqkv_t, bqkv, wo_t, bo, *, num_heads,
                            q_tile=None):
    """x: (B, S, C) f32, mask: (B, S) bool (True == masked-out key) or None.

    Linear weights are pre-transposed: y = x @ W_t + b  (matches nn.Linear).
      wqkv_t: (C, 3C), bqkv: (1, 3C), wo_t: (C, C), bo: (1, C)
    """
    B, S, C = x.shape
    assert C % num_heads == 0
    head_dim = C // num_heads

    # Query tile: 128 rows when S divides evenly (VMEM-friendly on v7x's
    # 64 MiB); otherwise fall back to the full (small / ragged) sequence.
    if q_tile is None:
        q_tile = 128 if (S % 128 == 0) else S
    assert S % q_tile == 0
    nq = S // q_tile

    # Split fused QKV, fold softmax scale into the Q projection, cast to bf16.
    scale = 1.0 / math.sqrt(head_dim)
    wq_t = (wqkv_t[:, :C] * scale).astype(jnp.bfloat16)      # (C, C)
    bq = (bqkv[:, :C] * scale).astype(jnp.float32)           # (1, C)
    wkv_t = wqkv_t[:, C:].astype(jnp.bfloat16)               # (C, 2C)  [K | V]
    bkv = bqkv[:, C:].astype(jnp.float32)                    # (1, 2C)
    wo_bf = wo_t.astype(jnp.bfloat16)
    bo_f = bo.astype(jnp.float32)

    # bf16 activations on the HBM side: halves x DMA + VMEM residency.
    x_bf = x.astype(jnp.bfloat16)

    # Additive key mask.  Large finite negative instead of -inf: a fully
    # masked row yields a uniform softmax (mean of V) rather than NaN.
    if mask is None:
        bias = jnp.zeros((B, 1, S), jnp.float32)
    else:
        bias = jnp.where(mask, jnp.float32(-1e30),
                         jnp.float32(0.0)).reshape(B, 1, S)

    kernel = functools.partial(_bidir_attn_kernel, num_heads=num_heads,
                               head_dim=head_dim, q_tile=q_tile)

    single = pl.Buffered(1)   # constant-index operands: no double buffering

    # Advisory cost estimate so XLA can schedule surrounding ops around us.
    flops = int(2 * B * S * C * (3 * C)          # QKV projection
                + 2 * B * S * C * C              # output projection
                + 4 * B * S * S * C)             # QK^T and P@V
    transcendentals = int(B * num_heads * S * S)
    bytes_accessed = int(2 * x_bf.size * x_bf.dtype.itemsize      # x (read twice)
                         + (wq_t.size + wkv_t.size + wo_bf.size) * 2
                         + (bq.size + bkv.size + bo_f.size + bias.size) * 4
                         + B * S * C * x.dtype.itemsize)          # output

    return pl.pallas_call(
        kernel,
        out_shape=jax.ShapeDtypeStruct((B, S, C), x.dtype),
        grid_spec=pltpu.PrefetchScalarGridSpec(
            num_scalar_prefetch=0,
            grid=(B, nq),
            in_specs=[
                pl.BlockSpec((1, q_tile, C), lambda b, q: (b, q, 0)),   # x (Q tile)
                pl.BlockSpec((1, S, C), lambda b, q: (b, 0, 0),
                             pipeline_mode=single),                     # x (full, qi==0)
                pl.BlockSpec((C, C), lambda b, q: (0, 0),
                             pipeline_mode=single),                     # Wq^T (scaled)
                pl.BlockSpec((1, C), lambda b, q: (0, 0),
                             pipeline_mode=single),                     # bq (scaled)
                pl.BlockSpec((C, 2 * C), lambda b, q: (0, 0),
                             pipeline_mode=single),                     # [Wk|Wv]^T
                pl.BlockSpec((1, 2 * C), lambda b, q: (0, 0),
                             pipeline_mode=single),                     # [bk|bv]
                pl.BlockSpec((C, C), lambda b, q: (0, 0),
                             pipeline_mode=single),                     # Wo^T
                pl.BlockSpec((1, C), lambda b, q: (0, 0),
                             pipeline_mode=single),                     # bo
                pl.BlockSpec((1, 1, S), lambda b, q: (b, 0, 0)),        # additive mask
            ],
            out_specs=pl.BlockSpec((1, q_tile, C), lambda b, q: (b, q, 0)),
            scratch_shapes=[
                pltpu.VMEM((num_heads, S, head_dim), jnp.bfloat16),     # K cache
                pltpu.VMEM((num_heads, S, head_dim), jnp.bfloat16),     # V cache
                pltpu.VMEM((q_tile, C), jnp.bfloat16),                  # ctx slab
            ]),
        compiler_params=pltpu.CompilerParams(
            dimension_semantics=("parallel", "arbitrary"),
            vmem_limit_bytes=32 * 1024 * 1024),
        cost_estimate=pl.CostEstimate(flops=flops,
                                      transcendentals=transcendentals,
                                      bytes_accessed=bytes_accessed),
    )(x_bf, x_bf, wq_t, bq, wkv_t, bkv, wo_bf, bo_f, bias)


def _reference(x, mask, wqkv_t, bqkv, wo_t, bo, num_heads):
    """Pure-JAX f32 replica of the PyTorch forward (dropout = identity)."""
    B, S, C = x.shape
    hd = C // num_heads
    qkv = x @ wqkv_t + bqkv                              # (B, S, 3C)
    qkv = qkv.reshape(B, S, 3, num_heads, hd)
    q = qkv[:, :, 0].transpose(0, 2, 1, 3)               # (B, nh, S, hd)
    k = qkv[:, :, 1].transpose(0, 2, 1, 3)
    v = qkv[:, :, 2].transpose(0, 2, 1, 3)
    attn = jnp.einsum("bhqd,bhkd->bhqk", q, k) / math.sqrt(hd)
    if mask is not None:
        attn = jnp.where(mask[:, None, None, :], -jnp.inf, attn)
    attn = jax.nn.softmax(attn, axis=-1)
    ctx = jnp.einsum("bhqk,bhkd->bhqd", attn, v)
    ctx = ctx.transpose(0, 2, 1, 3).reshape(B, S, C)
    return ctx @ wo_t + bo


if __name__ == "__main__":
    B, S, C, NH = 2, 8, 32, 4

    key = jax.random.PRNGKey(0)
    kx, kw1, kb1, kw2, kb2 = jax.random.split(key, 5)

    # PyTorch nn.Linear default init: U(-1/sqrt(fan_in), 1/sqrt(fan_in)).
    lim = 1.0 / math.sqrt(C)
    x = jax.random.normal(kx, (B, S, C), jnp.float32)
    wqkv_t = jax.random.uniform(kw1, (C, 3 * C), jnp.float32, -lim, lim)
    bqkv = jax.random.uniform(kb1, (1, 3 * C), jnp.float32, -lim, lim)
    wo_t = jax.random.uniform(kw2, (C, C), jnp.float32, -lim, lim)
    bo = jax.random.uniform(kb2, (1, C), jnp.float32, -lim, lim)

    # mask: True == key position is masked out (last two keys of each sequence).
    mask = jnp.zeros((B, S), bool).at[:, -2:].set(True)

    out = bidirectional_attention(x, mask, wqkv_t, bqkv, wo_t, bo, num_heads=NH)
    out = jax.block_until_ready(out)

    ref = _reference(x, mask, wqkv_t, bqkv, wo_t, bo, NH)
    # bf16 activations/weights on the MXU (f32 accumulation) + approx
    # reciprocal -> loosened tolerance vs the all-f32 reference.
    np.testing.assert_allclose(np.asarray(out), np.asarray(ref),
                               rtol=2e-2, atol=2e-2)
    print("KERNEL_OK")
</pallas_src>

<mosaic_0001>
module attributes {stable_mosaic.version = 11 : i64} {
  func.func @_bidir_attn_kernel(%arg0: i32, %arg1: i32, %arg2: memref<1x8x32xbf16, #tpu.memory_space<vmem>>, %arg3: memref<1x8x32xbf16, #tpu.memory_space<vmem>>, %arg4: memref<32x32xbf16, #tpu.memory_space<vmem>>, %arg5: memref<1x32xf32, #tpu.memory_space<vmem>>, %arg6: memref<32x64xbf16, #tpu.memory_space<vmem>>, %arg7: memref<1x64xf32, #tpu.memory_space<vmem>>, %arg8: memref<32x32xbf16, #tpu.memory_space<vmem>>, %arg9: memref<1x32xf32, #tpu.memory_space<vmem>>, %arg10: memref<1x1x8xf32, #tpu.memory_space<vmem>>, %arg11: memref<1x8x32xf32, #tpu.memory_space<vmem>>, %arg12: memref<4x8x8xbf16, #tpu.memory_space<vmem>>, %arg13: memref<4x8x8xbf16, #tpu.memory_space<vmem>>, %arg14: memref<8x32xbf16, #tpu.memory_space<vmem>>) attributes {dimension_semantics = [#tpu.dimension_semantics<parallel>, #tpu.dimension_semantics<arbitrary>], iteration_bounds = array<i64: 2, 1>, scalar_prefetch = 0 : i64, scratch_operands = 3 : i64, tpu.core_type = #tpu.core_type<tc>, window_params = [{transform_indices = @transform_0, window_bounds = array<i64: 1, 8, 32>}, {pipeline_mode = #tpu.pipeline_mode<synchronous>, transform_indices = @transform_1, window_bounds = array<i64: 1, 8, 32>}, {pipeline_mode = #tpu.pipeline_mode<synchronous>, transform_indices = @transform_2, window_bounds = array<i64: 32, 32>}, {pipeline_mode = #tpu.pipeline_mode<synchronous>, transform_indices = @transform_3, window_bounds = array<i64: 1, 32>}, {pipeline_mode = #tpu.pipeline_mode<synchronous>, transform_indices = @transform_4, window_bounds = array<i64: 32, 64>}, {pipeline_mode = #tpu.pipeline_mode<synchronous>, transform_indices = @transform_5, window_bounds = array<i64: 1, 64>}, {pipeline_mode = #tpu.pipeline_mode<synchronous>, transform_indices = @transform_6, window_bounds = array<i64: 32, 32>}, {pipeline_mode = #tpu.pipeline_mode<synchronous>, transform_indices = @transform_7, window_bounds = array<i64: 1, 32>}, {transform_indices = @transform_8, window_bounds = array<i64: 1, 1, 8>}, {transform_indices = @transform_9, window_bounds = array<i64: 1, 8, 32>}]} {
    %c0_i32 = arith.constant 0 : i32
    %0 = arith.cmpi eq, %arg1, %c0_i32 : i32
    %1 = arith.extui %0 : i1 to i32
    %c0_i32_0 = arith.constant 0 : i32
    %2 = arith.cmpi ne, %1, %c0_i32_0 : i32
    scf.if %2 {
      %c0_62 = arith.constant 0 : index
      %c0_63 = arith.constant 0 : index
      %c0_64 = arith.constant 0 : index
      %108 = vector.load %arg3[%c0_62, %c0_63, %c0_64] : memref<1x8x32xbf16, #tpu.memory_space<vmem>>, vector<1x8x32xbf16>
      %109 = vector.shape_cast %108 : vector<1x8x32xbf16> to vector<8x32xbf16>
      %c0_65 = arith.constant 0 : index
      %c0_66 = arith.constant 0 : index
      %110 = vector.load %arg6[%c0_65, %c0_66] : memref<32x64xbf16, #tpu.memory_space<vmem>>, vector<32x64xbf16>
      %cst_67 = arith.constant dense<0.000000e+00> : vector<8x64xf32>
      %111 = tpu.matmul %109, %110, %cst_67 {dimension_numbers = #tpu.dot_dimension_numbers<[1], [0], [0], [1], [0, 0, 1, 1], [], []>} : vector<8x32xbf16>, vector<32x64xbf16>, vector<8x64xf32> -> vector<8x64xf32>
      %c0_68 = arith.constant 0 : index
      %c0_69 = arith.constant 0 : index
      %112 = vector.load %arg7[%c0_68, %c0_69] : memref<1x64xf32, #tpu.memory_space<vmem>>, vector<1x64xf32>
      %113 = vector.broadcast %112 : vector<1x64xf32> to vector<8x64xf32>
      %114 = arith.addf %111, %113 : vector<8x64xf32>
      %115 = arith.truncf %114 : vector<8x64xf32> to vector<8x64xbf16>
      %116 = vector.extract_strided_slice %115 {offsets = [0, 0], sizes = [8, 8], strides = [1, 1]} : vector<8x64xbf16> to vector<8x8xbf16>
      %c0_70 = arith.constant 0 : index
      %c0_71 = arith.constant 0 : index
      %c0_72 = arith.constant 0 : index
      %117 = vector.load %arg12[%c0_70, %c0_71, %c0_72] : memref<4x8x8xbf16, #tpu.memory_space<vmem>>, vector<1x8x8xbf16>
      %118 = vector.shape_cast %117 : vector<1x8x8xbf16> to vector<8x8xbf16>
      %119 = vector.shape_cast %116 : vector<8x8xbf16> to vector<1x8x8xbf16>
      tpu.vector_store %arg12[%c0_70, %c0_71, %c0_72], %119 {strides = array<i32>} : memref<4x8x8xbf16, #tpu.memory_space<vmem>>, vector<1x8x8xbf16>,
      %120 = vector.extract_strided_slice %115 {offsets = [0, 32], sizes = [8, 8], strides = [1, 1]} : vector<8x64xbf16> to vector<8x8xbf16>
      %c0_73 = arith.constant 0 : index
      %c0_74 = arith.constant 0 : index
      %c0_75 = arith.constant 0 : index
      %121 = vector.load %arg13[%c0_73, %c0_74, %c0_75] : memref<4x8x8xbf16, #tpu.memory_space<vmem>>, vector<1x8x8xbf16>
      %122 = vector.shape_cast %121 : vector<1x8x8xbf16> to vector<8x8xbf16>
      %123 = vector.shape_cast %120 : vector<8x8xbf16> to vector<1x8x8xbf16>
      tpu.vector_store %arg13[%c0_73, %c0_74, %c0_75], %123 {strides = array<i32>} : memref<4x8x8xbf16, #tpu.memory_space<vmem>>, vector<1x8x8xbf16>,
      %124 = vector.extract_strided_slice %115 {offsets = [0, 8], sizes = [8, 8], strides = [1, 1]} : vector<8x64xbf16> to vector<8x8xbf16>
      %c1_76 = arith.constant 1 : index
      %c0_77 = arith.constant 0 : index
      %c0_78 = arith.constant 0 : index
      %125 = vector.load %arg12[%c1_76, %c0_77, %c0_78] : memref<4x8x8xbf16, #tpu.memory_space<vmem>>, vector<1x8x8xbf16>
      %126 = vector.shape_cast %125 : vector<1x8x8xbf16> to vector<8x8xbf16>
      %127 = vector.shape_cast %124 : vector<8x8xbf16> to vector<1x8x8xbf16>
      tpu.vector_store %arg12[%c1_76, %c0_77, %c0_78], %127 {strides = array<i32>} : memref<4x8x8xbf16, #tpu.memory_space<vmem>>, vector<1x8x8xbf16>,
      %128 = vector.extract_strided_slice %115 {offsets = [0, 40], sizes = [8, 8], strides = [1, 1]} : vector<8x64xbf16> to vector<8x8xbf16>
      %c1_79 = arith.constant 1 : index
      %c0_80 = arith.constant 0 : index
      %c0_81 = arith.constant 0 : index
      %129 = vector.load %arg13[%c1_79, %c0_80, %c0_81] : memref<4x8x8xbf16, #tpu.memory_space<vmem>>, vector<1x8x8xbf16>
      %130 = vector.shape_cast %129 : vector<1x8x8xbf16> to vector<8x8xbf16>
      %131 = vector.shape_cast %128 : vector<8x8xbf16> to vector<1x8x8xbf16>
      tpu.vector_store %arg13[%c1_79, %c0_80, %c0_81], %131 {strides = array<i32>} : memref<4x8x8xbf16, #tpu.memory_space<vmem>>, vector<1x8x8xbf16>,
      %132 = vector.extract_strided_slice %115 {offsets = [0, 16], sizes = [8, 8], strides = [1, 1]} : vector<8x64xbf16> to vector<8x8xbf16>
      %c2_82 = arith.constant 2 : index
      %c0_83 = arith.constant 0 : index
      %c0_84 = arith.constant 0 : index
      %133 = vector.load %arg12[%c2_82, %c0_83, %c0_84] : memref<4x8x8xbf16, #tpu.memory_space<vmem>>, vector<1x8x8xbf16>
      %134 = vector.shape_cast %133 : vector<1x8x8xbf16> to vector<8x8xbf16>
      %135 = vector.shape_cast %132 : vector<8x8xbf16> to vector<1x8x8xbf16>
      tpu.vector_store %arg12[%c2_82, %c0_83, %c0_84], %135 {strides = array<i32>} : memref<4x8x8xbf16, #tpu.memory_space<vmem>>, vector<1x8x8xbf16>,
      %136 = vector.extract_strided_slice %115 {offsets = [0, 48], sizes = [8, 8], strides = [1, 1]} : vector<8x64xbf16> to vector<8x8xbf16>
      %c2_85 = arith.constant 2 : index
      %c0_86 = arith.constant 0 : index
      %c0_87 = arith.constant 0 : index
      %137 = vector.load %arg13[%c2_85, %c0_86, %c0_87] : memref<4x8x8xbf16, #tpu.memory_space<vmem>>, vector<1x8x8xbf16>
      %138 = vector.shape_cast %137 : vector<1x8x8xbf16> to vector<8x8xbf16>
      %139 = vector.shape_cast %136 : vector<8x8xbf16> to vector<1x8x8xbf16>
      tpu.vector_store %arg13[%c2_85, %c0_86, %c0_87], %139 {strides = array<i32>} : memref<4x8x8xbf16, #tpu.memory_space<vmem>>, vector<1x8x8xbf16>,
      %140 = vector.extract_strided_slice %115 {offsets = [0, 24], sizes = [8, 8], strides = [1, 1]} : vector<8x64xbf16> to vector<8x8xbf16>
      %c3_88 = arith.constant 3 : index
      %c0_89 = arith.constant 0 : index
      %c0_90 = arith.constant 0 : index
      %141 = vector.load %arg12[%c3_88, %c0_89, %c0_90] : memref<4x8x8xbf16, #tpu.memory_space<vmem>>, vector<1x8x8xbf16>
      %142 = vector.shape_cast %141 : vector<1x8x8xbf16> to vector<8x8xbf16>
      %143 = vector.shape_cast %140 : vector<8x8xbf16> to vector<1x8x8xbf16>
      tpu.vector_store %arg12[%c3_88, %c0_89, %c0_90], %143 {strides = array<i32>} : memref<4x8x8xbf16, #tpu.memory_space<vmem>>, vector<1x8x8xbf16>,
      %144 = vector.extract_strided_slice %115 {offsets = [0, 56], sizes = [8, 8], strides = [1, 1]} : vector<8x64xbf16> to vector<8x8xbf16>
      %c3_91 = arith.constant 3 : index
      %c0_92 = arith.constant 0 : index
      %c0_93 = arith.constant 0 : index
      %145 = vector.load %arg13[%c3_91, %c0_92, %c0_93] : memref<4x8x8xbf16, #tpu.memory_space<vmem>>, vector<1x8x8xbf16>
      %146 = vector.shape_cast %145 : vector<1x8x8xbf16> to vector<8x8xbf16>
      %147 = vector.shape_cast %144 : vector<8x8xbf16> to vector<1x8x8xbf16>
      tpu.vector_store %arg13[%c3_91, %c0_92, %c0_93], %147 {strides = array<i32>} : memref<4x8x8xbf16, #tpu.memory_space<vmem>>, vector<1x8x8xbf16>,
    } else {
    }
    %c0 = arith.constant 0 : index
    %c0_1 = arith.constant 0 : index
    %c0_2 = arith.constant 0 : index
    %3 = vector.load %arg2[%c0, %c0_1, %c0_2] : memref<1x8x32xbf16, #tpu.memory_space<vmem>>, vector<1x8x32xbf16>
    %4 = vector.shape_cast %3 : vector<1x8x32xbf16> to vector<8x32xbf16>
    %c0_3 = arith.constant 0 : index
    %c0_4 = arith.constant 0 : index
    %5 = vector.load %arg4[%c0_3, %c0_4] : memref<32x32xbf16, #tpu.memory_space<vmem>>, vector<32x32xbf16>
    %cst = arith.constant dense<0.000000e+00> : vector<8x32xf32>
    %6 = tpu.matmul %4, %5, %cst {dimension_numbers = #tpu.dot_dimension_numbers<[1], [0], [0], [1], [0, 0, 1, 1], [], []>} : vector<8x32xbf16>, vector<32x32xbf16>, vector<8x32xf32> -> vector<8x32xf32>
    %c0_5 = arith.constant 0 : index
    %c0_6 = arith.constant 0 : index
    %7 = vector.load %arg5[%c0_5, %c0_6] : memref<1x32xf32, #tpu.memory_space<vmem>>, vector<1x32xf32>
    %8 = vector.broadcast %7 : vector<1x32xf32> to vector<8x32xf32>
    %9 = arith.addf %6, %8 : vector<8x32xf32>
    %10 = arith.truncf %9 : vector<8x32xf32> to vector<8x32xbf16>
    %c0_7 = arith.constant 0 : index
    %c0_8 = arith.constant 0 : index
    %c0_9 = arith.constant 0 : index
    %11 = vector.load %arg10[%c0_7, %c0_8, %c0_9] : memref<1x1x8xf32, #tpu.memory_space<vmem>>, vector<1x1x8xf32>
    %12 = vector.shape_cast %11 : vector<1x1x8xf32> to vector<1x8xf32>
    %13 = vector.shape_cast %12 : vector<1x8xf32> to vector<1x8xf32>
    %14 = vector.broadcast %13 : vector<1x8xf32> to vector<8x8xf32>
    %15 = vector.extract_strided_slice %10 {offsets = [0, 0], sizes = [8, 8], strides = [1, 1]} : vector<8x32xbf16> to vector<8x8xbf16>
    %c0_10 = arith.constant 0 : index
    %c0_11 = arith.constant 0 : index
    %c0_12 = arith.constant 0 : index
    %16 = vector.load %arg12[%c0_10, %c0_11, %c0_12] : memref<4x8x8xbf16, #tpu.memory_space<vmem>>, vector<1x8x8xbf16>
    %17 = vector.shape_cast %16 : vector<1x8x8xbf16> to vector<8x8xbf16>
    %c0_13 = arith.constant 0 : index
    %c0_14 = arith.constant 0 : index
    %c0_15 = arith.constant 0 : index
    %18 = vector.load %arg13[%c0_13, %c0_14, %c0_15] : memref<4x8x8xbf16, #tpu.memory_space<vmem>>, vector<1x8x8xbf16>
    %19 = vector.shape_cast %18 : vector<1x8x8xbf16> to vector<8x8xbf16>
    %cst_16 = arith.constant dense<0.000000e+00> : vector<8x8xf32>
    %20 = tpu.matmul %15, %17, %cst_16 {dimension_numbers = #tpu.dot_dimension_numbers<[1], [1], [0], [0], [0, 0, 1, 0], [], []>} : vector<8x8xbf16>, vector<8x8xbf16>, vector<8x8xf32> -> vector<8x8xf32>
    %21 = arith.addf %20, %14 : vector<8x8xf32>
    %cst_17 = arith.constant dense<0xFF800000> : vector<8xf32>
    %22 = vector.multi_reduction <maximumf>, %21, %cst_17 [1] : vector<8x8xf32> to vector<8xf32>
    %23 = vector.shape_cast %22 : vector<8xf32> to vector<8x1xf32>
    %24 = vector.broadcast %23 : vector<8x1xf32> to vector<8x8xf32>
    %25 = arith.subf %21, %24 : vector<8x8xf32>
    %26 = math.exp %25 : vector<8x8xf32>
    %cst_18 = arith.constant dense<0.000000e+00> : vector<8xf32>
    %27 = vector.multi_reduction <add>, %26, %cst_18 [1] : vector<8x8xf32> to vector<8xf32>
    %28 = vector.shape_cast %27 : vector<8xf32> to vector<8x1xf32>
    %29 = tpu.reciprocal %28 {approx = true} : vector<8x1xf32> -> vector<8x1xf32>
    %30 = vector.broadcast %29 : vector<8x1xf32> to vector<8x8xf32>
    %31 = arith.mulf %26, %30 : vector<8x8xf32>
    %32 = arith.truncf %31 : vector<8x8xf32> to vector<8x8xbf16>
    %cst_19 = arith.constant dense<0.000000e+00> : vector<8x8xf32>
    %33 = tpu.matmul %32, %19, %cst_19 {dimension_numbers = #tpu.dot_dimension_numbers<[1], [0], [0], [1], [0, 0, 1, 1], [], []>} : vector<8x8xbf16>, vector<8x8xbf16>, vector<8x8xf32> -> vector<8x8xf32>
    %34 = arith.truncf %33 : vector<8x8xf32> to vector<8x8xbf16>
    %c0_20 = arith.constant 0 : index
    %c0_21 = arith.constant 0 : index
    %35 = vector.load %arg14[%c0_20, %c0_21] : memref<8x32xbf16, #tpu.memory_space<vmem>>, vector<8x8xbf16>
    tpu.vector_store %arg14[%c0_20, %c0_21], %34 {strides = array<i32>} : memref<8x32xbf16, #tpu.memory_space<vmem>>, vector<8x8xbf16>,
    %36 = vector.extract_strided_slice %10 {offsets = [0, 8], sizes = [8, 8], strides = [1, 1]} : vector<8x32xbf16> to vector<8x8xbf16>
    %c1 = arith.constant 1 : index
    %c0_22 = arith.constant 0 : index
    %c0_23 = arith.constant 0 : index
    %37 = vector.load %arg12[%c1, %c0_22, %c0_23] : memref<4x8x8xbf16, #tpu.memory_space<vmem>>, vector<1x8x8xbf16>
    %38 = vector.shape_cast %37 : vector<1x8x8xbf16> to vector<8x8xbf16>
    %c1_24 = arith.constant 1 : index
    %c0_25 = arith.constant 0 : index
    %c0_26 = arith.constant 0 : index
    %39 = vector.load %arg13[%c1_24, %c0_25, %c0_26] : memref<4x8x8xbf16, #tpu.memory_space<vmem>>, vector<1x8x8xbf16>
    %40 = vector.shape_cast %39 : vector<1x8x8xbf16> to vector<8x8xbf16>
    %cst_27 = arith.constant dense<0.000000e+00> : vector<8x8xf32>
    %41 = tpu.matmul %36, %38, %cst_27 {dimension_numbers = #tpu.dot_dimension_numbers<[1], [1], [0], [0], [0, 0, 1, 0], [], []>} : vector<8x8xbf16>, vector<8x8xbf16>, vector<8x8xf32> -> vector<8x8xf32>
    %42 = arith.addf %41, %14 : vector<8x8xf32>
    %cst_28 = arith.constant dense<0xFF800000> : vector<8xf32>
    %43 = vector.multi_reduction <maximumf>, %42, %cst_28 [1] : vector<8x8xf32> to vector<8xf32>
    %44 = vector.shape_cast %43 : vector<8xf32> to vector<8x1xf32>
    %45 = vector.broadcast %44 : vector<8x1xf32> to vector<8x8xf32>
    %46 = arith.subf %42, %45 : vector<8x8xf32>
    %47 = math.exp %46 : vector<8x8xf32>
    %cst_29 = arith.constant dense<0.000000e+00> : vector<8xf32>
    %48 = vector.multi_reduction <add>, %47, %cst_29 [1] : vector<8x8xf32> to vector<8xf32>
    %49 = vector.shape_cast %48 : vector<8xf32> to vector<8x1xf32>
    %50 = tpu.reciprocal %49 {approx = true} : vector<8x1xf32> -> vector<8x1xf32>
    %51 = vector.broadcast %50 : vector<8x1xf32> to vector<8x8xf32>
    %52 = arith.mulf %47, %51 : vector<8x8xf32>
    %53 = arith.truncf %52 : vector<8x8xf32> to vector<8x8xbf16>
    %cst_30 = arith.constant dense<0.000000e+00> : vector<8x8xf32>
    %54 = tpu.matmul %53, %40, %cst_30 {dimension_numbers = #tpu.dot_dimension_numbers<[1], [0], [0], [1], [0, 0, 1, 1], [], []>} : vector<8x8xbf16>, vector<8x8xbf16>, vector<8x8xf32> -> vector<8x8xf32>
    %55 = arith.truncf %54 : vector<8x8xf32> to vector<8x8xbf16>
    %c0_31 = arith.constant 0 : index
    %c8 = arith.constant 8 : index
    %56 = vector.load %arg14[%c0_31, %c8] : memref<8x32xbf16, #tpu.memory_space<vmem>>, vector<8x8xbf16>
    tpu.vector_store %arg14[%c0_31, %c8], %55 {strides = array<i32>} : memref<8x32xbf16, #tpu.memory_space<vmem>>, vector<8x8xbf16>,
    %57 = vector.extract_strided_slice %10 {offsets = [0, 16], sizes = [8, 8], strides = [1, 1]} : vector<8x32xbf16> to vector<8x8xbf16>
    %c2 = arith.constant 2 : index
    %c0_32 = arith.constant 0 : index
    %c0_33 = arith.constant 0 : index
    %58 = vector.load %arg12[%c2, %c0_32, %c0_33] : memref<4x8x8xbf16, #tpu.memory_space<vmem>>, vector<1x8x8xbf16>
    %59 = vector.shape_cast %58 : vector<1x8x8xbf16> to vector<8x8xbf16>
    %c2_34 = arith.constant 2 : index
    %c0_35 = arith.constant 0 : index
    %c0_36 = arith.constant 0 : index
    %60 = vector.load %arg13[%c2_34, %c0_35, %c0_36] : memref<4x8x8xbf16, #tpu.memory_space<vmem>>, vector<1x8x8xbf16>
    %61 = vector.shape_cast %60 : vector<1x8x8xbf16> to vector<8x8xbf16>
    %cst_37 = arith.constant dense<0.000000e+00> : vector<8x8xf32>
    %62 = tpu.matmul %57, %59, %cst_37 {dimension_numbers = #tpu.dot_dimension_numbers<[1], [1], [0], [0], [0, 0, 1, 0], [], []>} : vector<8x8xbf16>, vector<8x8xbf16>, vector<8x8xf32> -> vector<8x8xf32>
    %63 = arith.addf %62, %14 : vector<8x8xf32>
    %cst_38 = arith.constant dense<0xFF800000> : vector<8xf32>
    %64 = vector.multi_reduction <maximumf>, %63, %cst_38 [1] : vector<8x8xf32> to vector<8xf32>
    %65 = vector.shape_cast %64 : vector<8xf32> to vector<8x1xf32>
    %66 = vector.broadcast %65 : vector<8x1xf32> to vector<8x8xf32>
    %67 = arith.subf %63, %66 : vector<8x8xf32>
    %68 = math.exp %67 : vector<8x8xf32>
    %cst_39 = arith.constant dense<0.000000e+00> : vector<8xf32>
    %69 = vector.multi_reduction <add>, %68, %cst_39 [1] : vector<8x8xf32> to vector<8xf32>
    %70 = vector.shape_cast %69 : vector<8xf32> to vector<8x1xf32>
    %71 = tpu.reciprocal %70 {approx = true} : vector<8x1xf32> -> vector<8x1xf32>
    %72 = vector.broadcast %71 : vector<8x1xf32> to vector<8x8xf32>
    %73 = arith.mulf %68, %72 : vector<8x8xf32>
    %74 = arith.truncf %73 : vector<8x8xf32> to vector<8x8xbf16>
    %cst_40 = arith.constant dense<0.000000e+00> : vector<8x8xf32>
    %75 = tpu.matmul %74, %61, %cst_40 {dimension_numbers = #tpu.dot_dimension_numbers<[1], [0], [0], [1], [0, 0, 1, 1], [], []>} : vector<8x8xbf16>, vector<8x8xbf16>, vector<8x8xf32> -> vector<8x8xf32>
    %76 = arith.truncf %75 : vector<8x8xf32> to vector<8x8xbf16>
    %c0_41 = arith.constant 0 : index
    %c16 = arith.constant 16 : index
    %77 = vector.load %arg14[%c0_41, %c16] : memref<8x32xbf16, #tpu.memory_space<vmem>>, vector<8x8xbf16>
    tpu.vector_store %arg14[%c0_41, %c16], %76 {strides = array<i32>} : memref<8x32xbf16, #tpu.memory_space<vmem>>, vector<8x8xbf16>,
    %78 = vector.extract_strided_slice %10 {offsets = [0, 24], sizes = [8, 8], strides = [1, 1]} : vector<8x32xbf16> to vector<8x8xbf16>
    %c3 = arith.constant 3 : index
    %c0_42 = arith.constant 0 : index
    %c0_43 = arith.constant 0 : index
    %79 = vector.load %arg12[%c3, %c0_42, %c0_43] : memref<4x8x8xbf16, #tpu.memory_space<vmem>>, vector<1x8x8xbf16>
    %80 = vector.shape_cast %79 : vector<1x8x8xbf16> to vector<8x8xbf16>
    %c3_44 = arith.constant 3 : index
    %c0_45 = arith.constant 0 : index
    %c0_46 = arith.constant 0 : index
    %81 = vector.load %arg13[%c3_44, %c0_45, %c0_46] : memref<4x8x8xbf16, #tpu.memory_space<vmem>>, vector<1x8x8xbf16>
    %82 = vector.shape_cast %81 : vector<1x8x8xbf16> to vector<8x8xbf16>
    %cst_47 = arith.constant dense<0.000000e+00> : vector<8x8xf32>
    %83 = tpu.matmul %78, %80, %cst_47 {dimension_numbers = #tpu.dot_dimension_numbers<[1], [1], [0], [0], [0, 0, 1, 0], [], []>} : vector<8x8xbf16>, vector<8x8xbf16>, vector<8x8xf32> -> vector<8x8xf32>
    %84 = arith.addf %83, %14 : vector<8x8xf32>
    %cst_48 = arith.constant dense<0xFF800000> : vector<8xf32>
    %85 = vector.multi_reduction <maximumf>, %84, %cst_48 [1] : vector<8x8xf32> to vector<8xf32>
    %86 = vector.shape_cast %85 : vector<8xf32> to vector<8x1xf32>
    %87 = vector.broadcast %86 : vector<8x1xf32> to vector<8x8xf32>
    %88 = arith.subf %84, %87 : vector<8x8xf32>
    %89 = math.exp %88 : vector<8x8xf32>
    %cst_49 = arith.constant dense<0.000000e+00> : vector<8xf32>
    %90 = vector.multi_reduction <add>, %89, %cst_49 [1] : vector<8x8xf32> to vector<8xf32>
    %91 = vector.shape_cast %90 : vector<8xf32> to vector<8x1xf32>
    %92 = tpu.reciprocal %91 {approx = true} : vector<8x1xf32> -> vector<8x1xf32>
    %93 = vector.broadcast %92 : vector<8x1xf32> to vector<8x8xf32>
    %94 = arith.mulf %89, %93 : vector<8x8xf32>
    %95 = arith.truncf %94 : vector<8x8xf32> to vector<8x8xbf16>
    %cst_50 = arith.constant dense<0.000000e+00> : vector<8x8xf32>
    %96 = tpu.matmul %95, %82, %cst_50 {dimension_numbers = #tpu.dot_dimension_numbers<[1], [0], [0], [1], [0, 0, 1, 1], [], []>} : vector<8x8xbf16>, vector<8x8xbf16>, vector<8x8xf32> -> vector<8x8xf32>
    %97 = arith.truncf %96 : vector<8x8xf32> to vector<8x8xbf16>
    %c0_51 = arith.constant 0 : index
    %c24 = arith.constant 24 : index
    %98 = vector.load %arg14[%c0_51, %c24] : memref<8x32xbf16, #tpu.memory_space<vmem>>, vector<8x8xbf16>
    tpu.vector_store %arg14[%c0_51, %c24], %97 {strides = array<i32>} : memref<8x32xbf16, #tpu.memory_space<vmem>>, vector<8x8xbf16>,
    %c0_52 = arith.constant 0 : index
    %c0_53 = arith.constant 0 : index
    %99 = vector.load %arg14[%c0_52, %c0_53] : memref<8x32xbf16, #tpu.memory_space<vmem>>, vector<8x32xbf16>
    %c0_54 = arith.constant 0 : index
    %c0_55 = arith.constant 0 : index
    %100 = vector.load %arg8[%c0_54, %c0_55] : memref<32x32xbf16, #tpu.memory_space<vmem>>, vector<32x32xbf16>
    %cst_56 = arith.constant dense<0.000000e+00> : vector<8x32xf32>
    %101 = tpu.matmul %99, %100, %cst_56 {dimension_numbers = #tpu.dot_dimension_numbers<[1], [0], [0], [1], [0, 0, 1, 1], [], []>} : vector<8x32xbf16>, vector<32x32xbf16>, vector<8x32xf32> -> vector<8x32xf32>
    %c0_57 = arith.constant 0 : index
    %c0_58 = arith.constant 0 : index
    %102 = vector.load %arg9[%c0_57, %c0_58] : memref<1x32xf32, #tpu.memory_space<vmem>>, vector<1x32xf32>
    %103 = vector.broadcast %102 : vector<1x32xf32> to vector<8x32xf32>
    %104 = arith.addf %101, %103 : vector<8x32xf32>
    %c0_59 = arith.constant 0 : index
    %c0_60 = arith.constant 0 : index
    %c0_61 = arith.constant 0 : index
    %105 = vector.load %arg11[%c0_59, %c0_60, %c0_61] : memref<1x8x32xf32, #tpu.memory_space<vmem>>, vector<1x8x32xf32>
    %106 = vector.shape_cast %105 : vector<1x8x32xf32> to vector<8x32xf32>
    %107 = vector.shape_cast %104 : vector<8x32xf32> to vector<1x8x32xf32>
    tpu.vector_store %arg11[%c0_59, %c0_60, %c0_61], %107 {strides = array<i32>} : memref<1x8x32xf32, #tpu.memory_space<vmem>>, vector<1x8x32xf32>,
    return
  }
  func.func @transform_0(%arg0: i32, %arg1: i32) -> (i32, i32, i32) {
    %c0_i32 = arith.constant 0 : i32
    %c0_i32_0 = arith.constant 0 : i32
    return %arg0, %arg1, %c0_i32 : i32, i32, i32
  }
  func.func @transform_1(%arg0: i32, %arg1: i32) -> (i32, i32, i32) {
    %c0_i32 = arith.constant 0 : i32
    %c0_i32_0 = arith.constant 0 : i32
    %c0_i32_1 = arith.constant 0 : i32
    return %arg0, %c0_i32, %c0_i32_0 : i32, i32, i32
  }
  func.func @transform_2(%arg0: i32, %arg1: i32) -> (i32, i32) {
    %c0_i32 = arith.constant 0 : i32
    %c0_i32_0 = arith.constant 0 : i32
    %c0_i32_1 = arith.constant 0 : i32
    return %c0_i32, %c0_i32_0 : i32, i32
  }
  func.func @transform_3(%arg0: i32, %arg1: i32) -> (i32, i32) {
    %c0_i32 = arith.constant 0 : i32
    %c0_i32_0 = arith.constant 0 : i32
    %c0_i32_1 = arith.constant 0 : i32
    return %c0_i32, %c0_i32_0 : i32, i32
  }
  func.func @transform_4(%arg0: i32, %arg1: i32) -> (i32, i32) {
    %c0_i32 = arith.constant 0 : i32
    %c0_i32_0 = arith.constant 0 : i32
    %c0_i32_1 = arith.constant 0 : i32
    return %c0_i32, %c0_i32_0 : i32, i32
  }
  func.func @transform_5(%arg0: i32, %arg1: i32) -> (i32, i32) {
    %c0_i32 = arith.constant 0 : i32
    %c0_i32_0 = arith.constant 0 : i32
    %c0_i32_1 = arith.constant 0 : i32
    return %c0_i32, %c0_i32_0 : i32, i32
  }
  func.func @transform_6(%arg0: i32, %arg1: i32) -> (i32, i32) {
    %c0_i32 = arith.constant 0 : i32
    %c0_i32_0 = arith.constant 0 : i32
    %c0_i32_1 = arith.constant 0 : i32
    return %c0_i32, %c0_i32_0 : i32, i32
  }
  func.func @transform_7(%arg0: i32, %arg1: i32) -> (i32, i32) {
    %c0_i32 = arith.constant 0 : i32
    %c0_i32_0 = arith.constant 0 : i32
    %c0_i32_1 = arith.constant 0 : i32
    return %c0_i32, %c0_i32_0 : i32, i32
  }
  func.func @transform_8(%arg0: i32, %arg1: i32) -> (i32, i32, i32) {
    %c0_i32 = arith.constant 0 : i32
    %c0_i32_0 = arith.constant 0 : i32
    %c0_i32_1 = arith.constant 0 : i32
    return %arg0, %c0_i32, %c0_i32_0 : i32, i32, i32
  }
  func.func @transform_9(%arg0: i32, %arg1: i32) -> (i32, i32, i32) {
    %c0_i32 = arith.constant 0 : i32
    %c0_i32_0 = arith.constant 0 : i32
    return %arg0, %arg1, %c0_i32 : i32, i32, i32
  }
}

</mosaic_0001>

<llo_original>
// kernel: tpu_custom_call.1
$region0: #{tpu_custom_call.1}
  #allocation0 [shape = 'u32[]', space=smem, size = 0x4, offset = 0x4, fixed_abs, tag = 'smem constant byte address 0x4 - core index']
  #allocation1 [shape = 'u32[144,128]{1,0:T(1,128)}', space=vmem, size = 0x12000, scoped, tag = 'internal scratch']
  #allocation2 [shape = 'bf16[4,8,8]{2,1,0:T(8,128)(2,1)}', space=vmem, size = 0x2000, scoped, tag = 'scratch operand']
  #allocation3 [shape = 'bf16[4,8,8]{2,1,0:T(8,128)(2,1)}', space=vmem, size = 0x2000, scoped, tag = 'scratch operand']
  #allocation4 [shape = 'bf16[8,32]{1,0:T(8,128)(2,1)}', space=vmem, size = 0x800, scoped, tag = 'scratch operand']
  %s0 = inlined_call_operand.hbm [shape: bf16[2,8,32], index: 0, kind: input, shape index: {}]
  %s1 = inlined_call_operand.hbm [shape: bf16[2,8,32], index: 1, kind: input, shape index: {}]
  %s2 = inlined_call_operand.hbm [shape: bf16[32,32], index: 2, kind: input, shape index: {}]
  %s3 = inlined_call_operand.vmem [shape: f32[1,32], index: 3, kind: input, shape index: {}]
  %s4 = inlined_call_operand.hbm [shape: bf16[32,64], index: 4, kind: input, shape index: {}]
  %s5 = inlined_call_operand.vmem [shape: f32[1,64], index: 5, kind: input, shape index: {}]
  %s6 = inlined_call_operand.vmem [shape: bf16[32,32], index: 6, kind: input, shape index: {}]
  %s7 = inlined_call_operand.vmem [shape: f32[1,32], index: 7, kind: input, shape index: {}]
  %s8 = inlined_call_operand.vmem [shape: f32[2,1,8], index: 8, kind: input, shape index: {}]
  %s9 = inlined_call_operand.hbm [shape: f32[2,8,32], index: 9, kind: output, shape index: {}]
  %s10 = sld [smem:[#allocation0]]
  $region89: #{tpu_custom_call.1} parent=0
    _
  %s12 = ssub.s32 1, %s10
  %s13 = scalar_select 0, %s12, %s10
  $region1: #{tpu_custom_call.1} parent=0
    #allocation5 [shape = 'u8[4096]{0}', space=vmem, size = 0x1000, scoped, tag = 'input window, operand 0']
    #allocation6 [shape = 's32[2]{0}', space=sflag, size = 0x8, scoped, tag = 'scoped memory for tpu_custom_call.1']
    #allocation7 [shape = 's32[2]{0}', space=sflag, size = 0x8, scoped, tag = 'scoped memory for tpu_custom_call.1']
    #allocation8 [shape = 'u8[2048]{0}', space=vmem, size = 0x800, scoped, tag = 'input window, operand 1, single buffered']
    #allocation9 [shape = 's32[1]{0}', space=sflag, size = 0x4, scoped, tag = 'scoped memory for tpu_custom_call.1']
    #allocation10 [shape = 'u8[8192]{0}', space=vmem, size = 0x2000, scoped, tag = 'input window, operand 2, single buffered']
    #allocation11 [shape = 'u8[8192]{0}', space=vmem, size = 0x2000, scoped, tag = 'input window, operand 4, single buffered']
    #allocation12 [shape = 's32[1]{0}', space=sflag, size = 0x4, scoped, tag = 'scoped memory for tpu_custom_call.1']
    #allocation13 [shape = 'u8[8192]{0}', space=vmem, size = 0x2000, scoped, tag = 'output window, operand 0']
    %14 = vsyncpa [#allocation6], 0
    %s15 = scalar_lea.sflag [#allocation6], 1
    %16 = vsyncpa %s15, 0
    %17 = vsyncpa [#allocation9], 0
    %18 = vsyncpa [#allocation12], 0
    %19 = vsyncpa [#allocation7], 0
    %s20 = scalar_lea.sflag [#allocation7], 1
    %21 = vsyncpa %s20, 0
    loop: start=0, step=1, limit=4
    $region2: #{tpu_custom_call.1} parent=1 // loop_pre_header
      _
    $region3: #{tpu_custom_call.1} parent=1 // loop_header
      %s23 = sphi 0, %s27
      %p24 = scmp.ge.s32.totalorder %s23, 4
      %s30 = sphi 0, %s42
      %s31 = sphi 0, %s38
      %s32 = sphi 0, %s30
      %s33 = sphi 0, %s31
      %s34 = sphi 0, %s32
      %s35 = sphi 0, %s33
      %s47 = sphi 0, %s49
      %s50 = sphi 0, %s47
      %s51 = sphi 0, %s50
      %s67 = sphi 0, %s51
      %s73 = sphi 0, %s75
      %s76 = sphi 0, %s73
      %s77 = sphi 0, %s76
      %s93 = sphi 0, %s77
      %s97 = sphi 0, %s97
      %s99 = sphi 0, %s97
      %s100 = sphi 0, %s99
      %s114 = sphi 0, %s100
      %s118 = sphi 0, %s118
      %s120 = sphi 0, %s118
      %s121 = sphi 0, %s120
      %s135 = sphi 0, %s121
      %s139 = sphi 0, %s139
      %s141 = sphi 0, %s139
      %s142 = sphi 0, %s141
      %s156 = sphi 0, %s142
      %s160 = sphi 0, %s160
      %s162 = sphi 0, %s160
      %s163 = sphi 0, %s162
      %s177 = sphi 0, %s163
      %s181 = sphi 0, %s181
      %s183 = sphi 0, %s181
      %s184 = sphi 0, %s183
      %s198 = sphi 0, %s184
      %s202 = sphi 0, %s202
      %s204 = sphi 0, %s202
      %s205 = sphi 0, %s204
      %s219 = sphi 0, %s205
      %s225 = sphi 0, %s227
      %s228 = sphi 0, %s225
      %s229 = sphi 0, %s228
      %s245 = sphi 0, %s229
      %s253 = sphi 0, %s255
      %s256 = sphi 0, %s253
      %s257 = sphi 0, %s256
      %s273 = sphi 0, %s257
    $region4: #{tpu_custom_call.1} parent=1 // loop_header_branch
      %26 = sbr.rel (%p24) target = $region8
    $region5: #{tpu_custom_call.1} parent=1 // loop_body
      %s28 = ssub.s32 %s23, 1
      %s29 = ssub.s32 %s23, 2
      %s36 = sadd.s32 1, %s31
      %p37 = scmp.ge.s32.totalorder %s36, 1
      %s38 = scalar_select %p37, 0, %s36
      %s39 = sadd.s32 1, %s30
      %s40 = scalar_select %p37, %s39, %s30
      %p41 = scmp.ge.s32.totalorder %s40, 2
      %s42 = scalar_select %p41, 0, %s40
      %s43 = ssub.s32 %s30, %s42
      %s44 = ssub.s32 %s31, %s38
      %s45 = sor.u32 %s43, %s44
      %p46 = scmp.eq.s32.totalorder %s45, 0
      %s48 = sadd.s32 %s47, 1
      %s49 = scalar_select %p46, %s47, %s48
      %p52 = pneg %p46
      %p53 = scmp.eq.s32.totalorder %s23, 1
      %p54 = por %p52, %p53
      %p55 = scmp.ne.s32.totalorder %s47, %s50
      %p56 = scmp.eq.s32.totalorder %s23, 0
      %p57 = por %p55, %p56
      %p58 = scmp.ne.s32.totalorder %s47, %s50
      %p59 = scmp.eq.s32.totalorder %s28, 1
      %p60 = por %p58, %p59
      %p61 = scmp.ne.s32.totalorder %s50, %s51
      %p62 = scmp.eq.s32.totalorder %s28, 0
      %p63 = por %p61, %p62
      %p64 = scmp.ne.s32.totalorder %s50, %s51
      %p65 = scmp.eq.s32.totalorder %s29, 1
      %p66 = por %p64, %p65
      %p68 = scmp.ne.s32.totalorder %s51, %s67
      %p69 = scmp.eq.s32.totalorder %s29, 0
      %p70 = por %p68, %p69
      %s71 = ssub.s32 %s30, %s42
      %p72 = scmp.eq.s32.totalorder %s71, 0
      %s74 = sadd.s32 %s73, 1
      %s75 = scalar_select %p72, %s73, %s74
      %p78 = pneg %p72
      %p79 = scmp.eq.s32.totalorder %s23, 1
      %p80 = por %p78, %p79
      %p81 = scmp.ne.s32.totalorder %s73, %s76
      %p82 = scmp.eq.s32.totalorder %s23, 0
      %p83 = por %p81, %p82
      %p84 = scmp.ne.s32.totalorder %s73, %s76
      %p85 = scmp.eq.s32.totalorder %s28, 1
      %p86 = por %p84, %p85
      %p87 = scmp.ne.s32.totalorder %s76, %s77
      %p88 = scmp.eq.s32.totalorder %s28, 0
      %p89 = por %p87, %p88
      %p90 = scmp.ne.s32.totalorder %s76, %s77
      %p91 = scmp.eq.s32.totalorder %s29, 1
      %p92 = por %p90, %p91
      %p94 = scmp.ne.s32.totalorder %s77, %s93
      %p95 = scmp.eq.s32.totalorder %s29, 0
      %p96 = por %p94, %p95
      %s98 = sadd.s32 %s97, 1
      %p101 = scmp.eq.s32.totalorder %s23, 1
      %p102 = scmp.ne.s32.totalorder %s97, %s99
      %p103 = scmp.eq.s32.totalorder %s23, 0
      %p104 = por %p102, %p103
      %p105 = scmp.ne.s32.totalorder %s97, %s99
      %p106 = scmp.eq.s32.totalorder %s28, 1
      %p107 = por %p105, %p106
      %p108 = scmp.ne.s32.totalorder %s99, %s100
      %p109 = scmp.eq.s32.totalorder %s28, 0
      %p110 = por %p108, %p109
      %p111 = scmp.ne.s32.totalorder %s99, %s100
      %p112 = scmp.eq.s32.totalorder %s29, 1
      %p113 = por %p111, %p112
      %p115 = scmp.ne.s32.totalorder %s100, %s114
      %p116 = scmp.eq.s32.totalorder %s29, 0
      %p117 = por %p115, %p116
      %s119 = sadd.s32 %s118, 1
      %p122 = scmp.eq.s32.totalorder %s23, 1
      %p123 = scmp.ne.s32.totalorder %s118, %s120
      %p124 = scmp.eq.s32.totalorder %s23, 0
      %p125 = por %p123, %p124
      %p126 = scmp.ne.s32.totalorder %s118, %s120
      %p127 = scmp.eq.s32.totalorder %s28, 1
      %p128 = por %p126, %p127
      %p129 = scmp.ne.s32.totalorder %s120, %s121
      %p130 = scmp.eq.s32.totalorder %s28, 0
      %p131 = por %p129, %p130
      %p132 = scmp.ne.s32.totalorder %s120, %s121
      %p133 = scmp.eq.s32.totalorder %s29, 1
      %p134 = por %p132, %p133
      %p136 = scmp.ne.s32.totalorder %s121, %s135
      %p137 = scmp.eq.s32.totalorder %s29, 0
      %p138 = por %p136, %p137
      %s140 = sadd.s32 %s139, 1
      %p143 = scmp.eq.s32.totalorder %s23, 1
      %p144 = scmp.ne.s32.totalorder %s139, %s141
      %p145 = scmp.eq.s32.totalorder %s23, 0
      %p146 = por %p144, %p145
      %p147 = scmp.ne.s32.totalorder %s139, %s141
      %p148 = scmp.eq.s32.totalorder %s28, 1
      %p149 = por %p147, %p148
      %p150 = scmp.ne.s32.totalorder %s141, %s142
      %p151 = scmp.eq.s32.totalorder %s28, 0
      %p152 = por %p150, %p151
      %p153 = scmp.ne.s32.totalorder %s141, %s142
      %p154 = scmp.eq.s32.totalorder %s29, 1
      %p155 = por %p153, %p154
      %p157 = scmp.ne.s32.totalorder %s142, %s156
      %p158 = scmp.eq.s32.totalorder %s29, 0
      %p159 = por %p157, %p158
      %s161 = sadd.s32 %s160, 1
      %p164 = scmp.eq.s32.totalorder %s23, 1
      %p165 = scmp.ne.s32.totalorder %s160, %s162
      %p166 = scmp.eq.s32.totalorder %s23, 0
      %p167 = por %p165, %p166
      %p168 = scmp.ne.s32.totalorder %s160, %s162
      %p169 = scmp.eq.s32.totalorder %s28, 1
      %p170 = por %p168, %p169
      %p171 = scmp.ne.s32.totalorder %s162, %s163
      %p172 = scmp.eq.s32.totalorder %s28, 0
      %p173 = por %p171, %p172
      %p174 = scmp.ne.s32.totalorder %s162, %s163
      %p175 = scmp.eq.s32.totalorder %s29, 1
      %p176 = por %p174, %p175
      %p178 = scmp.ne.s32.totalorder %s163, %s177
      %p179 = scmp.eq.s32.totalorder %s29, 0
      %p180 = por %p178, %p179
      %s182 = sadd.s32 %s181, 1
      %p185 = scmp.eq.s32.totalorder %s23, 1
      %p186 = scmp.ne.s32.totalorder %s181, %s183
      %p187 = scmp.eq.s32.totalorder %s23, 0
      %p188 = por %p186, %p187
      %p189 = scmp.ne.s32.totalorder %s181, %s183
      %p190 = scmp.eq.s32.totalorder %s28, 1
      %p191 = por %p189, %p190
      %p192 = scmp.ne.s32.totalorder %s183, %s184
      %p193 = scmp.eq.s32.totalorder %s28, 0
      %p194 = por %p192, %p193
      %p195 = scmp.ne.s32.totalorder %s183, %s184
      %p196 = scmp.eq.s32.totalorder %s29, 1
      %p197 = por %p195, %p196
      %p199 = scmp.ne.s32.totalorder %s184, %s198
      %p200 = scmp.eq.s32.totalorder %s29, 0
      %p201 = por %p199, %p200
      %s203 = sadd.s32 %s202, 1
      %p206 = scmp.eq.s32.totalorder %s23, 1
      %p207 = scmp.ne.s32.totalorder %s202, %s204
      %p208 = scmp.eq.s32.totalorder %s23, 0
      %p209 = por %p207, %p208
      %p210 = scmp.ne.s32.totalorder %s202, %s204
      %p211 = scmp.eq.s32.totalorder %s28, 1
      %p212 = por %p210, %p211
      %p213 = scmp.ne.s32.totalorder %s204, %s205
      %p214 = scmp.eq.s32.totalorder %s28, 0
      %p215 = por %p213, %p214
      %p216 = scmp.ne.s32.totalorder %s204, %s205
      %p217 = scmp.eq.s32.totalorder %s29, 1
      %p218 = por %p216, %p217
      %p220 = scmp.ne.s32.totalorder %s205, %s219
      %p221 = scmp.eq.s32.totalorder %s29, 0
      %p222 = por %p220, %p221
      %s223 = ssub.s32 %s30, %s42
      %p224 = scmp.eq.s32.totalorder %s223, 0
      %s226 = sadd.s32 %s225, 1
      %s227 = scalar_select %p224, %s225, %s226
      %p230 = pneg %p224
      %p231 = scmp.eq.s32.totalorder %s23, 1
      %p232 = por %p230, %p231
      %p233 = scmp.ne.s32.totalorder %s225, %s228
      %p234 = scmp.eq.s32.totalorder %s23, 0
      %p235 = por %p233, %p234
      %p236 = scmp.ne.s32.totalorder %s225, %s228
      %p237 = scmp.eq.s32.totalorder %s28, 1
      %p238 = por %p236, %p237
      %p239 = scmp.ne.s32.totalorder %s228, %s229
      %p240 = scmp.eq.s32.totalorder %s28, 0
      %p241 = por %p239, %p240
      %p242 = scmp.ne.s32.totalorder %s228, %s229
      %p243 = scmp.eq.s32.totalorder %s29, 1
      %p244 = por %p242, %p243
      %p246 = scmp.ne.s32.totalorder %s229, %s245
      %p247 = scmp.eq.s32.totalorder %s29, 0
      %p248 = por %p246, %p247
      %s249 = ssub.s32 %s30, %s42
      %s250 = ssub.s32 %s31, %s38
      %s251 = sor.u32 %s249, %s250
      %p252 = scmp.eq.s32.totalorder %s251, 0
      %s254 = sadd.s32 %s253, 1
      %s255 = scalar_select %p252, %s253, %s254
      %p258 = pneg %p252
      %p259 = scmp.eq.s32.totalorder %s23, 1
      %p260 = por %p258, %p259
      %p261 = scmp.ne.s32.totalorder %s253, %s256
      %p262 = scmp.eq.s32.totalorder %s23, 0
      %p263 = por %p261, %p262
      %p264 = scmp.ne.s32.totalorder %s253, %s256
      %p265 = scmp.eq.s32.totalorder %s28, 1
      %p266 = por %p264, %p265
      %p267 = scmp.ne.s32.totalorder %s256, %s257
      %p268 = scmp.eq.s32.totalorder %s28, 0
      %p269 = por %p267, %p268
      %p270 = scmp.ne.s32.totalorder %s256, %s257
      %p271 = scmp.eq.s32.totalorder %s29, 1
      %p272 = por %p270, %p271
      %p274 = scmp.ne.s32.totalorder %s257, %s273
      %p275 = scmp.eq.s32.totalorder %s29, 0
      %p276 = por %p274, %p275
      %p277 = scmp.le.s32.totalorder 1, %s23
      %p278 = scmp.lt.s32.totalorder %s23, 3
      %p279 = pnand %p277, %p278
      %p280 = pneg %p279
      // Predicated region
      $region9: #{tpu_custom_call.1} parent=5 // pred_check
        _
      $region10: #{tpu_custom_call.1} parent=5 // pred_check_branch
        %282 = sbr.rel (%p279) target = $region12
      $region11: #{tpu_custom_call.1} parent=5 // pred_region
        %s283 = ssub.s32 %s23, 1
        // Predicated region
        $region13: #{tpu_custom_call.1} parent=11 // pred_check
          %p284 = pneg %p89
        $region14: #{tpu_custom_call.1} parent=11 // pred_check_branch
          %286 = sbr.rel (%p284) target = $region16
        $region15: #{tpu_custom_call.1} parent=11 // pred_region
          %s288 = ssub.s32 64, 64
          %289 = vsyncadd [#allocation9], %s288
          %s290 = smul.addr %s32, 64
          %s291 = scalar_lea.hbm %s1, %s290
          %s293 = sshll.u32 [#allocation8], 4
          %s294 = int_to_ptr.vmem [resolvable:$true] %s293
          %296 = dma.hbm_to_vmem [thread:$0]  %s291, 64, %s294, [#allocation9]
        $region16: #{tpu_custom_call.1} parent=11 // pred_fallthru
          _
        // Predicated region
        $region17: #{tpu_custom_call.1} parent=11 // pred_check
          %p297 = pneg %p110
        $region18: #{tpu_custom_call.1} parent=11 // pred_check_branch
          %299 = sbr.rel (%p297) target = $region20
        $region19: #{tpu_custom_call.1} parent=11 // pred_region
          %s301 = ssub.s32 256, 256
          %302 = vsyncadd [#allocation9], %s301
          %s303 = sshll.u32 [#allocation10], 4
          %s304 = int_to_ptr.vmem [resolvable:$true] %s303
          %309 = dma.hbm_to_vmem [thread:$0]  %s2, 256, %s304, [#allocation9], 64, 64, 4
        $region20: #{tpu_custom_call.1} parent=11 // pred_fallthru
          _
        // Predicated region
        $region21: #{tpu_custom_call.1} parent=11 // pred_check
          %p310 = pneg %p131
        $region22: #{tpu_custom_call.1} parent=11 // pred_check_branch
          %312 = sbr.rel (%p310) target = $region24
        $region23: #{tpu_custom_call.1} parent=11 // pred_region
          _
        $region24: #{tpu_custom_call.1} parent=11 // pred_fallthru
          _
        // Predicated region
        $region25: #{tpu_custom_call.1} parent=11 // pred_check
          %p313 = pneg %p152
        $region26: #{tpu_custom_call.1} parent=11 // pred_check_branch
          %315 = sbr.rel (%p313) target = $region28
        $region27: #{tpu_custom_call.1} parent=11 // pred_region
          %s317 = ssub.s32 256, 256
          %318 = vsyncadd [#allocation12], %s317
          %s319 = sshll.u32 [#allocation11], 4
          %s320 = int_to_ptr.vmem [resolvable:$true] %s319
          %325 = dma.hbm_to_vmem [thread:$0]  %s4, 256, %s320, [#allocation12], 64, 64, 4
        $region28: #{tpu_custom_call.1} parent=11 // pred_fallthru
          _
        // Predicated region
        $region29: #{tpu_custom_call.1} parent=11 // pred_check
          %p326 = pneg %p173
        $region30: #{tpu_custom_call.1} parent=11 // pred_check_branch
          %328 = sbr.rel (%p326) target = $region32
        $region31: #{tpu_custom_call.1} parent=11 // pred_region
          _
        $region32: #{tpu_custom_call.1} parent=11 // pred_fallthru
          _
        // Predicated region
        $region33: #{tpu_custom_call.1} parent=11 // pred_check
          %p329 = pneg %p194
        $region34: #{tpu_custom_call.1} parent=11 // pred_check_branch
          %331 = sbr.rel (%p329) target = $region36
        $region35: #{tpu_custom_call.1} parent=11 // pred_region
          _
        $region36: #{tpu_custom_call.1} parent=11 // pred_fallthru
          _
        // Predicated region
        $region37: #{tpu_custom_call.1} parent=11 // pred_check
          %p332 = pneg %p215
        $region38: #{tpu_custom_call.1} parent=11 // pred_check_branch
          %334 = sbr.rel (%p332) target = $region40
        $region39: #{tpu_custom_call.1} parent=11 // pred_region
          _
        $region40: #{tpu_custom_call.1} parent=11 // pred_fallthru
          _
      $region12: #{tpu_custom_call.1} parent=5 // pred_fallthru
        _
      %p335 = scmp.lt.s32.totalorder %s23, 2
      // Predicated region
      $region41: #{tpu_custom_call.1} parent=5 // pred_check
        %p336 = pneg %p335
      $region42: #{tpu_custom_call.1} parent=5 // pred_check_branch
        %338 = sbr.rel (%p336) target = $region44
      $region43: #{tpu_custom_call.1} parent=5 // pred_region
        // Predicated region
        $region45: #{tpu_custom_call.1} parent=43 // pred_check
          %p339 = pneg %p57
        $region46: #{tpu_custom_call.1} parent=43 // pred_check_branch
          %341 = sbr.rel (%p339) target = $region48
        $region47: #{tpu_custom_call.1} parent=43 // pred_region
          %s342 = sand.u32 %s47, 1
          %s343 = scalar_lea.sflag [#allocation6], %s342
          %s344 = sand.u32 %s47, 1
          %s345 = smul.addr %s344, 4
          %s346 = scalar_lea.vmem [#allocation5], %s345
          %s348 = ssub.s32 64, 64
          %349 = vsyncadd %s343, %s348
          %s350 = sadd.s32 %s31, %s30
          %s351 = smul.addr %s350, 64
          %s352 = scalar_lea.hbm %s0, %s351
          %s354 = sshll.u32 %s346, 4
          %s355 = int_to_ptr.vmem [resolvable:$true] %s354
          %357 = dma.hbm_to_vmem [thread:$0]  %s352, 64, %s355, %s343
        $region48: #{tpu_custom_call.1} parent=43 // pred_fallthru
          _
        // Predicated region
        $region49: #{tpu_custom_call.1} parent=43 // pred_check
          %p358 = pneg %p235
        $region50: #{tpu_custom_call.1} parent=43 // pred_check_branch
          %360 = sbr.rel (%p358) target = $region52
        $region51: #{tpu_custom_call.1} parent=43 // pred_region
          %p361 = scmp.lt.s32.totalorder %s30, 1
          %s362 = scalar_select %p361, %s30, 1
          %s363 = scalar_lea.vmem %s8, %s362
        $region52: #{tpu_custom_call.1} parent=43 // pred_fallthru
          _
      $region44: #{tpu_custom_call.1} parent=5 // pred_fallthru
        _
      %p364 = scmp.le.s32.totalorder 1, %s23
      %p365 = scmp.lt.s32.totalorder %s23, 3
      %p366 = pnand %p364, %p365
      %p367 = pneg %p366
      // Predicated region
      $region53: #{tpu_custom_call.1} parent=5 // pred_check
        _
      $region54: #{tpu_custom_call.1} parent=5 // pred_check_branch
        %369 = sbr.rel (%p366) target = $region56
      $region55: #{tpu_custom_call.1} parent=5 // pred_region
        %s370 = ssub.s32 %s23, 1
        %s371 = sand.u32 %s50, 1
        %s372 = scalar_lea.sflag [#allocation6], %s371
        %s373 = sand.u32 %s50, 1
        %s374 = smul.addr %s373, 4
        %s375 = scalar_lea.vmem [#allocation5], %s374
        // Predicated region
        $region57: #{tpu_custom_call.1} parent=55 // pred_check
          %p376 = pneg %p63
        $region58: #{tpu_custom_call.1} parent=55 // pred_check_branch
          %378 = sbr.rel (%p376) target = $region60
        $region59: #{tpu_custom_call.1} parent=55 // pred_region
          %379 = dma.done %s372, 64
        $region60: #{tpu_custom_call.1} parent=55 // pred_fallthru
          _
        // Predicated region
        $region61: #{tpu_custom_call.1} parent=55 // pred_check
          %p380 = pneg %p89
        $region62: #{tpu_custom_call.1} parent=55 // pred_check_branch
          %382 = sbr.rel (%p380) target = $region64
        $region63: #{tpu_custom_call.1} parent=55 // pred_region
          %383 = dma.done [#allocation9], 64
        $region64: #{tpu_custom_call.1} parent=55 // pred_fallthru
          _
        // Predicated region
        $region65: #{tpu_custom_call.1} parent=55 // pred_check
          %p384 = pneg %p110
        $region66: #{tpu_custom_call.1} parent=55 // pred_check_branch
          %386 = sbr.rel (%p384) target = $region68
        $region67: #{tpu_custom_call.1} parent=55 // pred_region
          %387 = dma.done [#allocation9], 256
        $region68: #{tpu_custom_call.1} parent=55 // pred_fallthru
          _
        // Predicated region
        $region69: #{tpu_custom_call.1} parent=55 // pred_check
          %p388 = pneg %p152
        $region70: #{tpu_custom_call.1} parent=55 // pred_check_branch
          %390 = sbr.rel (%p388) target = $region72
        $region71: #{tpu_custom_call.1} parent=55 // pred_region
          %391 = dma.done [#allocation12], 256
        $region72: #{tpu_custom_call.1} parent=55 // pred_fallthru
          _
        %s392 = sand.u32 %s50, 1
        %s393 = scalar_lea.sflag [#allocation6], %s392
        %s394 = sand.u32 %s50, 1
        %s395 = smul.addr %s394, 4
        %s396 = scalar_lea.vmem [#allocation5], %s395
        %p397 = pneg %p63
        %p398 = pneg %p60
        %p399 = pneg %p89
        %p400 = pneg %p86
        %p401 = pneg %p110
        %p402 = pneg %p107
        %p403 = pneg %p131
        %p404 = pneg %p128
        %p405 = pneg %p152
        %p406 = pneg %p149
        %p407 = pneg %p173
        %p408 = pneg %p170
        %p409 = pneg %p194
        %p410 = pneg %p191
        %p411 = pneg %p215
        %p412 = pneg %p212
        %p413 = scmp.lt.s32.totalorder %s32, 1
        %s414 = scalar_select %p413, %s32, 1
        %s415 = scalar_lea.vmem %s8, %s414
        %p416 = pneg %p241
        %p417 = pneg %p238
        %p418 = pneg %p269
        %p419 = pneg %p266
        %s420 = sand.u32 %s256, 1
        %s421 = scalar_lea.sflag [#allocation7], %s420
        %s422 = sand.u32 %s256, 1
        %s423 = smul.addr %s422, 8
        %s424 = scalar_lea.vmem [#allocation13], %s423
        %p425 = scmp.lt.s32.totalorder %s32, 1
        %s426 = scalar_select %p425, %s32, 1
        %s427 = scalar_lea.vmem %s8, %s426
        %p429 = scmp.eq.s32.totalorder %s33, 0
        // Predicated region
        $region73: #{tpu_custom_call.1} parent=55 // pred_check
          %p430 = pneg %p429
        $region74: #{tpu_custom_call.1} parent=55 // pred_check_branch
          %432 = sbr.rel (%p430) target = $region76
        $region75: #{tpu_custom_call.1} parent=55 // pred_region
          %v433 = vld [vmem:[#allocation8] sm:$0xf]
          %v434 = vld [vmem:[#allocation11] sm:$0xf]
          %v435 = vld [vmem:[#allocation11 + $0x4] sm:$0xf]
          %v436 = vld [vmem:[#allocation11 + $0x8] sm:$0xf]
          %v437 = vld [vmem:[#allocation11 + $0xc] sm:$0xf]
          %v438 = vld [vmem:[%s5] sm:$0x1]
          %v440 = vlaneseq
          %v441 = vshrl.u32 %v440, 7
          %v442 = vsub.s32 0, %v441
          %v443 = vrot.slane %v438, %v442
          %v449 = vunpack.c.l.b16 %v434
          %v450 = vunpack.c.l.b16 %v435
          %v451 = vunpack.c.l.b16 %v436
          %v452 = vunpack.c.l.b16 %v437
          %v453 = vpack.c.b16 %v450, %v449
          %v454 = vpack.c.b16 %v452, %v451
          %vm457 = vcmask 261120
          %v459 = vsel %vm457, %v433, 0
          %461 = vmatprep.subr.bf16.mxu0 0
          %462 = vmatpush1.bf16.msra.mxu0 %v453
          %463 = vmatprep.subr.bf16.mxu0 0
          %464 = vmatpush1.bf16.msra.mxu0 %v454
          %465 = vmatprep.subr.bf16.mxu0 0
          %466 = vmatpush1.bf16.msra.mxu0 0
          %467 = vmatprep.subr.bf16.mxu0 0
          %468 = vmatpush1.bf16.msra.mxu0 0
          %469 = vmatprep.subr.bf16.mxu0 0
          %470 = vmatpush1.bf16.msra.mxu0 0
          %471 = vmatprep.subr.bf16.mxu0 0
          %472 = vmatpush1.bf16.msra.mxu0 0
          %473 = vmatprep.subr.bf16.mxu0 0
          %474 = vmatpush1.bf16.msra.mxu0 0
          %475 = vmatprep.subr.bf16.mxu0 0
          %476 = vmatpush1.bf16.msra.mxu0 0
          %477 = vmatprep.subr.bf16.mxu0 0
          %478 = vmatpush1.bf16.msra.mxu0 0
          %479 = vmatprep.subr.bf16.mxu0 0
          %480 = vmatpush1.bf16.msra.mxu0 0
          %481 = vmatprep.subr.bf16.mxu0 0
          %482 = vmatpush1.bf16.msra.mxu0 0
          %483 = vmatprep.subr.bf16.mxu0 0
          %484 = vmatpush1.bf16.msra.mxu0 0
          %485 = vmatprep.subr.bf16.mxu0 0
          %486 = vmatpush1.bf16.msra.mxu0 0
          %487 = vmatprep.subr.bf16.mxu0 0
          %488 = vmatpush1.bf16.msra.mxu0 0
          %489 = vmatprep.subr.bf16.mxu0 0
          %490 = vmatpush1.bf16.msra.mxu0 0
          %491 = vmatprep.subr.bf16.mxu0 0
          %492 = vmatpush1.bf16.msra.mxu0 0
          %493 = vmatprep.mubr.bf16.mxu0 0
          %494 = vmatmul.mubr.bf16.gmra.mrb[0].mxu0 %v459
          %v495 = vpop.f32.mrb[0].mxu0
          %v496 = vadd.f32 %v443, %v495
          %v497 = vpop.f32.mrb[0].mxu0
          %v498 = vpop.f32.mrb[0].mxu0
          %v499 = vpop.f32.mrb[0].mxu0
          %500 = vdwg.mxu0
          %v501 = vpack.c.bf16 %v496, %v496
          %vm502 = vcmask 60416
          %503 = vst.msk [vmem:[#allocation2] sm:$0xf] %vm502, %v501
          %v505 = vunpack.c.l.b16 %v501
          %v506 = vpack.c.b16 %v505, %v505
          %507 = vrot.lane.b32.xlu0 %v506, 96
          %v508 = vpop.permute.xlu0 %507
          %510 = vst.msk [vmem:[#allocation3] sm:$0xf] %vm502, %v508
          %511 = vrot.lane.b32.xlu0 %v506, 120
          %v512 = vpop.permute.xlu0 %511
          %s514 = scalar_lea.vmem [#allocation2], 4
          %515 = vst.msk [vmem:[%s514] sm:$0xf] %vm502, %v512
          %516 = vrot.lane.b32.xlu0 %v506, 88
          %v517 = vpop.permute.xlu0 %516
          %s519 = scalar_lea.vmem [#allocation3], 4
          %520 = vst.msk [vmem:[%s519] sm:$0xf] %vm502, %v517
          %521 = vrot.lane.b32.xlu0 %v506, 112
          %v522 = vpop.permute.xlu0 %521
          %s524 = scalar_lea.vmem [#allocation2], 8
          %525 = vst.msk [vmem:[%s524] sm:$0xf] %vm502, %v522
          %526 = vrot.lane.b32.xlu0 %v506, 80
          %v527 = vpop.permute.xlu0 %526
          %s529 = scalar_lea.vmem [#allocation3], 8
          %530 = vst.msk [vmem:[%s529] sm:$0xf] %vm502, %v527
          %531 = vrot.lane.b32.xlu0 %v506, 104
          %v532 = vpop.permute.xlu0 %531
          %s534 = scalar_lea.vmem [#allocation2], 12
          %535 = vst.msk [vmem:[%s534] sm:$0xf] %vm502, %v532
          %536 = vrot.lane.b32.xlu0 %v506, 72
          %v537 = vpop.permute.xlu0 %536
          %s539 = scalar_lea.vmem [#allocation3], 12
          %540 = vst.msk [vmem:[%s539] sm:$0xf] %vm502, %v537
        $region76: #{tpu_custom_call.1} parent=55 // pred_fallthru
          _
        %v541 = vld [vmem:[%s375] sm:$0xf]
        %v542 = vld [vmem:[#allocation10] sm:$0xf]
        %v543 = vld [vmem:[#allocation10 + $0x4] sm:$0xf]
        %v544 = vld [vmem:[#allocation10 + $0x8] sm:$0xf]
        %v545 = vld [vmem:[#allocation10 + $0xc] sm:$0xf]
        %v546 = vld [vmem:[%s3] sm:$0x1]
        %v548 = vlaneseq
        %v549 = vshrl.u32 %v548, 7
        %v550 = vsub.s32 0, %v549
        %v551 = vrot.slane %v546, %v550
        %v557 = vunpack.c.l.b16 %v542
        %v558 = vunpack.c.l.b16 %v543
        %v559 = vunpack.c.l.b16 %v544
        %v560 = vunpack.c.l.b16 %v545
        %v561 = vpack.c.b16 %v558, %v557
        %v562 = vpack.c.b16 %v560, %v559
        %vm565 = vcmask 261120
        %v567 = vsel %vm565, %v541, 0
        %569 = vmatprep.subr.bf16.mxu0 0
        %570 = vmatpush1.bf16.msra.mxu0 %v561
        %571 = vmatprep.subr.bf16.mxu0 0
        %572 = vmatpush1.bf16.msra.mxu0 %v562
        %573 = vmatprep.subr.bf16.mxu0 0
        %574 = vmatpush1.bf16.msra.mxu0 0
        %575 = vmatprep.subr.bf16.mxu0 0
        %576 = vmatpush1.bf16.msra.mxu0 0
        %577 = vmatprep.subr.bf16.mxu0 0
        %578 = vmatpush1.bf16.msra.mxu0 0
        %579 = vmatprep.subr.bf16.mxu0 0
        %580 = vmatpush1.bf16.msra.mxu0 0
        %581 = vmatprep.subr.bf16.mxu0 0
        %582 = vmatpush1.bf16.msra.mxu0 0
        %583 = vmatprep.subr.bf16.mxu0 0
        %584 = vmatpush1.bf16.msra.mxu0 0
        %585 = vmatprep.subr.bf16.mxu0 0
        %586 = vmatpush1.bf16.msra.mxu0 0
        %587 = vmatprep.subr.bf16.mxu0 0
        %588 = vmatpush1.bf16.msra.mxu0 0
        %589 = vmatprep.subr.bf16.mxu0 0
        %590 = vmatpush1.bf16.msra.mxu0 0
        %591 = vmatprep.subr.bf16.mxu0 0
        %592 = vmatpush1.bf16.msra.mxu0 0
        %593 = vmatprep.subr.bf16.mxu0 0
        %594 = vmatpush1.bf16.msra.mxu0 0
        %595 = vmatprep.subr.bf16.mxu0 0
        %596 = vmatpush1.bf16.msra.mxu0 0
        %597 = vmatprep.subr.bf16.mxu0 0
        %598 = vmatpush1.bf16.msra.mxu0 0
        %599 = vmatprep.subr.bf16.mxu0 0
        %600 = vmatpush1.bf16.msra.mxu0 0
        %601 = vmatprep.mubr.bf16.mxu0 0
        %602 = vmatmul.mubr.bf16.gmra.mrb[0].mxu0 %v567
        %v603 = vpop.f32.mrb[0].mxu0
        %v604 = vadd.f32 %v551, %v603
        %v605 = vpop.f32.mrb[0].mxu0
        %v606 = vpop.f32.mrb[0].mxu0
        %v607 = vpop.f32.mrb[0].mxu0
        %608 = vdwg.mxu0
        %v609 = vpack.c.bf16 %v604, %v604
        %v610 = vld [vmem:[%s427] sm:$0x1]
        %v612 = vlaneseq
        %v613 = vshrl.u32 %v612, 7
        %v614 = vsub.s32 0, %v613
        %v615 = vrot.slane %v610, %v614
        %v617 = vld [vmem:[#allocation2] sm:$0xf]
        %v618 = vld [vmem:[#allocation3] sm:$0xf]
        %vm619 = vcmask 64512
        %v621 = vsel %vm619, %v609, 0
        %v624 = vsel %vm619, %v617, 0
        %626 = vmatprep.subr.bf16.mxu0 0
        %627 = vmatpush1.bf16.xpose.msra.mxu0 %v624
        %628 = vmatprep.subr.bf16.mxu0 0
        %629 = vmatpush1.bf16.xpose.msra.mxu0 0
        %630 = vmatprep.subr.bf16.mxu0 0
        %631 = vmatpush1.bf16.xpose.msra.mxu0 0
        %632 = vmatprep.subr.bf16.mxu0 0
        %633 = vmatpush1.bf16.xpose.msra.mxu0 0
        %634 = vmatprep.subr.bf16.mxu0 0
        %635 = vmatpush1.bf16.xpose.msra.mxu0 0
        %636 = vmatprep.subr.bf16.mxu0 0
        %637 = vmatpush1.bf16.xpose.msra.mxu0 0
        %638 = vmatprep.subr.bf16.mxu0 0
        %639 = vmatpush1.bf16.xpose.msra.mxu0 0
        %640 = vmatprep.subr.bf16.mxu0 0
        %641 = vmatpush1.bf16.xpose.msra.mxu0 0
        %642 = vmatprep.subr.bf16.mxu0 0
        %643 = vmatpush1.bf16.xpose.msra.mxu0 0
        %644 = vmatprep.subr.bf16.mxu0 0
        %645 = vmatpush1.bf16.xpose.msra.mxu0 0
        %646 = vmatprep.subr.bf16.mxu0 0
        %647 = vmatpush1.bf16.xpose.msra.mxu0 0
        %648 = vmatprep.subr.bf16.mxu0 0
        %649 = vmatpush1.bf16.xpose.msra.mxu0 0
        %650 = vmatprep.subr.bf16.mxu0 0
        %651 = vmatpush1.bf16.xpose.msra.mxu0 0
        %652 = vmatprep.subr.bf16.mxu0 0
        %653 = vmatpush1.bf16.xpose.msra.mxu0 0
        %654 = vmatprep.subr.bf16.mxu0 0
        %655 = vmatpush1.bf16.xpose.msra.mxu0 0
        %656 = vmatprep.subr.bf16.mxu0 0
        %657 = vmatpush1.bf16.xpose.msra.mxu0 0
        %658 = vmatprep.mubr.bf16.mxu0 0
        %659 = vmatmul.mubr.bf16.gmra.mrb[0].mxu0 %v621
        %v660 = vpop.f32.mrb[0].mxu0
        %v661 = vadd.f32 %v615, %v660
        %v662 = vpop.f32.mrb[0].mxu0
        %v663 = vpop.f32.mrb[0].mxu0
        %v664 = vpop.f32.mrb[0].mxu0
        %665 = vdwg.mxu0
        %v666 = vsel %vm619, %v661, -inf
        %667 = vmax.xlane.f32.xlu0 %v666
        %v668 = vpop.xlane.xlu0 %667
        %v669 = vsub.f32 %v661, %v668
        %v670 = vmul.f32 %v669, 1.442695
        %v671 = vpow.pop %v670
        %v672 = vsel %vm619, %v671, 0.0
        %673 = vadd.xlane.f32.xlu0 %v672
        %v674 = vpop.xlane.xlu0 %673
        %v675 = vrcp.pop %v674
        %v676 = vmul.f32 %v671, %v675
        %v677 = vpack.c.bf16 %v676, %v676
        %v679 = vsel %vm619, %v677, 0
        %vm681 = vcmask 1043456
        %v683 = vsel %vm681, %v618, 0
        %685 = vmatprep.subr.bf16.mxu0 0
        %686 = vmatpush1.bf16.msra.mxu0 %v683
        %687 = vmatprep.subr.bf16.mxu0 0
        %688 = vmatpush1.bf16.msra.mxu0 0
        %689 = vmatprep.subr.bf16.mxu0 0
        %690 = vmatpush1.bf16.msra.mxu0 0
        %691 = vmatprep.subr.bf16.mxu0 0
        %692 = vmatpush1.bf16.msra.mxu0 0
        %693 = vmatprep.subr.bf16.mxu0 0
        %694 = vmatpush1.bf16.msra.mxu0 0
        %695 = vmatprep.subr.bf16.mxu0 0
        %696 = vmatpush1.bf16.msra.mxu0 0
        %697 = vmatprep.subr.bf16.mxu0 0
        %698 = vmatpush1.bf16.msra.mxu0 0
        %699 = vmatprep.subr.bf16.mxu0 0
        %700 = vmatpush1.bf16.msra.mxu0 0
        %701 = vmatprep.subr.bf16.mxu0 0
        %702 = vmatpush1.bf16.msra.mxu0 0
        %703 = vmatprep.subr.bf16.mxu0 0
        %704 = vmatpush1.bf16.msra.mxu0 0
        %705 = vmatprep.subr.bf16.mxu0 0
        %706 = vmatpush1.bf16.msra.mxu0 0
        %707 = vmatprep.subr.bf16.mxu0 0
        %708 = vmatpush1.bf16.msra.mxu0 0
        %709 = vmatprep.subr.bf16.mxu0 0
        %710 = vmatpush1.bf16.msra.mxu0 0
        %711 = vmatprep.subr.bf16.mxu0 0
        %712 = vmatpush1.bf16.msra.mxu0 0
        %713 = vmatprep.subr.bf16.mxu0 0
        %714 = vmatpush1.bf16.msra.mxu0 0
        %715 = vmatprep.subr.bf16.mxu0 0
        %716 = vmatpush1.bf16.msra.mxu0 0
        %717 = vmatprep.mubr.bf16.mxu0 0
        %718 = vmatmul.mubr.bf16.gmra.mrb[0].mxu0 %v679
        %v719 = vpop.f32.mrb[0].mxu0
        %v720 = vadd.f32 0.0, %v719
        %v721 = vpop.f32.mrb[0].mxu0
        %v722 = vpop.f32.mrb[0].mxu0
        %v723 = vpop.f32.mrb[0].mxu0
        %724 = vdwg.mxu0
        %v725 = vpack.c.bf16 %v720, %v720
        %vm726 = vcmask 60416
        %727 = vst.msk [vmem:[#allocation4] sm:$0xf] %vm726, %v725
        %s728 = scalar_lea.vmem [#allocation2], 4
        %v729 = vld [vmem:[%s728] sm:$0xf]
        %s730 = scalar_lea.vmem [#allocation3], 4
        %v731 = vld [vmem:[%s730] sm:$0xf]
        %733 = vrot.lane.b32.xlu0 %v609, 120
        %v734 = vpop.permute.xlu0 %733
        %v736 = vsel %vm619, %v734, 0
        %v739 = vsel %vm619, %v729, 0
        %741 = vmatprep.subr.bf16.mxu0 0
        %742 = vmatpush1.bf16.xpose.msra.mxu0 %v739
        %743 = vmatprep.subr.bf16.mxu0 0
        %744 = vmatpush1.bf16.xpose.msra.mxu0 0
        %745 = vmatprep.subr.bf16.mxu0 0
        %746 = vmatpush1.bf16.xpose.msra.mxu0 0
        %747 = vmatprep.subr.bf16.mxu0 0
        %748 = vmatpush1.bf16.xpose.msra.mxu0 0
        %749 = vmatprep.subr.bf16.mxu0 0
        %750 = vmatpush1.bf16.xpose.msra.mxu0 0
        %751 = vmatprep.subr.bf16.mxu0 0
        %752 = vmatpush1.bf16.xpose.msra.mxu0 0
        %753 = vmatprep.subr.bf16.mxu0 0
        %754 = vmatpush1.bf16.xpose.msra.mxu0 0
        %755 = vmatprep.subr.bf16.mxu0 0
        %756 = vmatpush1.bf16.xpose.msra.mxu0 0
        %757 = vmatprep.subr.bf16.mxu0 0
        %758 = vmatpush1.bf16.xpose.msra.mxu0 0
        %759 = vmatprep.subr.bf16.mxu0 0
        %760 = vmatpush1.bf16.xpose.msra.mxu0 0
        %761 = vmatprep.subr.bf16.mxu0 0
        %762 = vmatpush1.bf16.xpose.msra.mxu0 0
        %763 = vmatprep.subr.bf16.mxu0 0
        %764 = vmatpush1.bf16.xpose.msra.mxu0 0
        %765 = vmatprep.subr.bf16.mxu0 0
        %766 = vmatpush1.bf16.xpose.msra.mxu0 0
        %767 = vmatprep.subr.bf16.mxu0 0
        %768 = vmatpush1.bf16.xpose.msra.mxu0 0
        %769 = vmatprep.subr.bf16.mxu0 0
        %770 = vmatpush1.bf16.xpose.msra.mxu0 0
        %771 = vmatprep.subr.bf16.mxu0 0
        %772 = vmatpush1.bf16.xpose.msra.mxu0 0
        %773 = vmatprep.mubr.bf16.mxu0 0
        %774 = vmatmul.mubr.bf16.gmra.mrb[0].mxu0 %v736
        %v775 = vpop.f32.mrb[0].mxu0
        %v776 = vadd.f32 %v615, %v775
        %v777 = vpop.f32.mrb[0].mxu0
        %v778 = vpop.f32.mrb[0].mxu0
        %v779 = vpop.f32.mrb[0].mxu0
        %780 = vdwg.mxu0
        %v781 = vsel %vm619, %v776, -inf
        %782 = vmax.xlane.f32.xlu0 %v781
        %v783 = vpop.xlane.xlu0 %782
        %v784 = vsub.f32 %v776, %v783
        %v785 = vmul.f32 %v784, 1.442695
        %v786 = vpow.pop %v785
        %v787 = vsel %vm619, %v786, 0.0
        %788 = vadd.xlane.f32.xlu0 %v787
        %v789 = vpop.xlane.xlu0 %788
        %v790 = vrcp.pop %v789
        %v791 = vmul.f32 %v786, %v790
        %v792 = vpack.c.bf16 %v791, %v791
        %v794 = vsel %vm619, %v792, 0
        %v797 = vsel %vm681, %v731, 0
        %799 = vmatprep.subr.bf16.mxu0 0
        %800 = vmatpush1.bf16.msra.mxu0 %v797
        %801 = vmatprep.subr.bf16.mxu0 0
        %802 = vmatpush1.bf16.msra.mxu0 0
        %803 = vmatprep.subr.bf16.mxu0 0
        %804 = vmatpush1.bf16.msra.mxu0 0
        %805 = vmatprep.subr.bf16.mxu0 0
        %806 = vmatpush1.bf16.msra.mxu0 0
        %807 = vmatprep.subr.bf16.mxu0 0
        %808 = vmatpush1.bf16.msra.mxu0 0
        %809 = vmatprep.subr.bf16.mxu0 0
        %810 = vmatpush1.bf16.msra.mxu0 0
        %811 = vmatprep.subr.bf16.mxu0 0
        %812 = vmatpush1.bf16.msra.mxu0 0
        %813 = vmatprep.subr.bf16.mxu0 0
        %814 = vmatpush1.bf16.msra.mxu0 0
        %815 = vmatprep.subr.bf16.mxu0 0
        %816 = vmatpush1.bf16.msra.mxu0 0
        %817 = vmatprep.subr.bf16.mxu0 0
        %818 = vmatpush1.bf16.msra.mxu0 0
        %819 = vmatprep.subr.bf16.mxu0 0
        %820 = vmatpush1.bf16.msra.mxu0 0
        %821 = vmatprep.subr.bf16.mxu0 0
        %822 = vmatpush1.bf16.msra.mxu0 0
        %823 = vmatprep.subr.bf16.mxu0 0
        %824 = vmatpush1.bf16.msra.mxu0 0
        %825 = vmatprep.subr.bf16.mxu0 0
        %826 = vmatpush1.bf16.msra.mxu0 0
        %827 = vmatprep.subr.bf16.mxu0 0
        %828 = vmatpush1.bf16.msra.mxu0 0
        %829 = vmatprep.subr.bf16.mxu0 0
        %830 = vmatpush1.bf16.msra.mxu0 0
        %831 = vmatprep.mubr.bf16.mxu0 0
        %832 = vmatmul.mubr.bf16.gmra.mrb[0].mxu0 %v794
        %v833 = vpop.f32.mrb[0].mxu0
        %v834 = vadd.f32 0.0, %v833
        %v835 = vpop.f32.mrb[0].mxu0
        %v836 = vpop.f32.mrb[0].mxu0
        %v837 = vpop.f32.mrb[0].mxu0
        %838 = vdwg.mxu0
        %v839 = vpack.c.bf16 %v834, %v834
        %v841 = vunpack.c.l.b16 %v839
        %v842 = vpack.c.b16 %v841, %v841
        %843 = vrot.lane.b32.xlu0 %v842, 8
        %v844 = vpop.permute.xlu0 %843
        %vm846 = vcmask 126016
        %847 = vst.msk [vmem:[#allocation4] sm:$0xf] %vm846, %v844
        %s848 = scalar_lea.vmem [#allocation2], 8
        %v849 = vld [vmem:[%s848] sm:$0xf]
        %s850 = scalar_lea.vmem [#allocation3], 8
        %v851 = vld [vmem:[%s850] sm:$0xf]
        %852 = vrot.lane.b32.xlu0 %v609, 112
        %v853 = vpop.permute.xlu0 %852
        %v855 = vsel %vm619, %v853, 0
        %v858 = vsel %vm619, %v849, 0
        %860 = vmatprep.subr.bf16.mxu0 0
        %861 = vmatpush1.bf16.xpose.msra.mxu0 %v858
        %862 = vmatprep.subr.bf16.mxu0 0
        %863 = vmatpush1.bf16.xpose.msra.mxu0 0
        %864 = vmatprep.subr.bf16.mxu0 0
        %865 = vmatpush1.bf16.xpose.msra.mxu0 0
        %866 = vmatprep.subr.bf16.mxu0 0
        %867 = vmatpush1.bf16.xpose.msra.mxu0 0
        %868 = vmatprep.subr.bf16.mxu0 0
        %869 = vmatpush1.bf16.xpose.msra.mxu0 0
        %870 = vmatprep.subr.bf16.mxu0 0
        %871 = vmatpush1.bf16.xpose.msra.mxu0 0
        %872 = vmatprep.subr.bf16.mxu0 0
        %873 = vmatpush1.bf16.xpose.msra.mxu0 0
        %874 = vmatprep.subr.bf16.mxu0 0
        %875 = vmatpush1.bf16.xpose.msra.mxu0 0
        %876 = vmatprep.subr.bf16.mxu0 0
        %877 = vmatpush1.bf16.xpose.msra.mxu0 0
        %878 = vmatprep.subr.bf16.mxu0 0
        %879 = vmatpush1.bf16.xpose.msra.mxu0 0
        %880 = vmatprep.subr.bf16.mxu0 0
        %881 = vmatpush1.bf16.xpose.msra.mxu0 0
        %882 = vmatprep.subr.bf16.mxu0 0
        %883 = vmatpush1.bf16.xpose.msra.mxu0 0
        %884 = vmatprep.subr.bf16.mxu0 0
        %885 = vmatpush1.bf16.xpose.msra.mxu0 0
        %886 = vmatprep.subr.bf16.mxu0 0
        %887 = vmatpush1.bf16.xpose.msra.mxu0 0
        %888 = vmatprep.subr.bf16.mxu0 0
        %889 = vmatpush1.bf16.xpose.msra.mxu0 0
        %890 = vmatprep.subr.bf16.mxu0 0
        %891 = vmatpush1.bf16.xpose.msra.mxu0 0
        %892 = vmatprep.mubr.bf16.mxu0 0
        %893 = vmatmul.mubr.bf16.gmra.mrb[0].mxu0 %v855
        %v894 = vpop.f32.mrb[0].mxu0
        %v895 = vadd.f32 %v615, %v894
        %v896 = vpop.f32.mrb[0].mxu0
        %v897 = vpop.f32.mrb[0].mxu0
        %v898 = vpop.f32.mrb[0].mxu0
        %899 = vdwg.mxu0
        %v900 = vsel %vm619, %v895, -inf
        %901 = vmax.xlane.f32.xlu0 %v900
        %v902 = vpop.xlane.xlu0 %901
        %v903 = vsub.f32 %v895, %v902
        %v904 = vmul.f32 %v903, 1.442695
        %v905 = vpow.pop %v904
        %v906 = vsel %vm619, %v905, 0.0
        %907 = vadd.xlane.f32.xlu0 %v906
        %v908 = vpop.xlane.xlu0 %907
        %v909 = vrcp.pop %v908
        %v910 = vmul.f32 %v905, %v909
        %v911 = vpack.c.bf16 %v910, %v910
        %v913 = vsel %vm619, %v911, 0
        %v916 = vsel %vm681, %v851, 0
        %918 = vmatprep.subr.bf16.mxu0 0
        %919 = vmatpush1.bf16.msra.mxu0 %v916
        %920 = vmatprep.subr.bf16.mxu0 0
        %921 = vmatpush1.bf16.msra.mxu0 0
        %922 = vmatprep.subr.bf16.mxu0 0
        %923 = vmatpush1.bf16.msra.mxu0 0
        %924 = vmatprep.subr.bf16.mxu0 0
        %925 = vmatpush1.bf16.msra.mxu0 0
        %926 = vmatprep.subr.bf16.mxu0 0
        %927 = vmatpush1.bf16.msra.mxu0 0
        %928 = vmatprep.subr.bf16.mxu0 0
        %929 = vmatpush1.bf16.msra.mxu0 0
        %930 = vmatprep.subr.bf16.mxu0 0
        %931 = vmatpush1.bf16.msra.mxu0 0
        %932 = vmatprep.subr.bf16.mxu0 0
        %933 = vmatpush1.bf16.msra.mxu0 0
        %934 = vmatprep.subr.bf16.mxu0 0
        %935 = vmatpush1.bf16.msra.mxu0 0
        %936 = vmatprep.subr.bf16.mxu0 0
        %937 = vmatpush1.bf16.msra.mxu0 0
        %938 = vmatprep.subr.bf16.mxu0 0
        %939 = vmatpush1.bf16.msra.mxu0 0
        %940 = vmatprep.subr.bf16.mxu0 0
        %941 = vmatpush1.bf16.msra.mxu0 0
        %942 = vmatprep.subr.bf16.mxu0 0
        %943 = vmatpush1.bf16.msra.mxu0 0
        %944 = vmatprep.subr.bf16.mxu0 0
        %945 = vmatpush1.bf16.msra.mxu0 0
        %946 = vmatprep.subr.bf16.mxu0 0
        %947 = vmatpush1.bf16.msra.mxu0 0
        %948 = vmatprep.subr.bf16.mxu0 0
        %949 = vmatpush1.bf16.msra.mxu0 0
        %950 = vmatprep.mubr.bf16.mxu0 0
        %951 = vmatmul.mubr.bf16.gmra.mrb[0].mxu0 %v913
        %v952 = vpop.f32.mrb[0].mxu0
        %v953 = vadd.f32 0.0, %v952
        %v954 = vpop.f32.mrb[0].mxu0
        %v955 = vpop.f32.mrb[0].mxu0
        %v956 = vpop.f32.mrb[0].mxu0
        %957 = vdwg.mxu0
        %v958 = vpack.c.bf16 %v953, %v953
        %v960 = vunpack.c.l.b16 %v958
        %v961 = vpack.c.b16 %v960, %v960
        %962 = vrot.lane.b32.xlu0 %v961, 16
        %v963 = vpop.permute.xlu0 %962
        %vm965 = vcmask 191616
        %966 = vst.msk [vmem:[#allocation4] sm:$0xf] %vm965, %v963
        %s967 = scalar_lea.vmem [#allocation2], 12
        %v968 = vld [vmem:[%s967] sm:$0xf]
        %s969 = scalar_lea.vmem [#allocation3], 12
        %v970 = vld [vmem:[%s969] sm:$0xf]
        %971 = vrot.lane.b32.xlu0 %v609, 104
        %v972 = vpop.permute.xlu0 %971
        %v974 = vsel %vm619, %v972, 0
        %v977 = vsel %vm619, %v968, 0
        %979 = vmatprep.subr.bf16.mxu0 0
        %980 = vmatpush1.bf16.xpose.msra.mxu0 %v977
        %981 = vmatprep.subr.bf16.mxu0 0
        %982 = vmatpush1.bf16.xpose.msra.mxu0 0
        %983 = vmatprep.subr.bf16.mxu0 0
        %984 = vmatpush1.bf16.xpose.msra.mxu0 0
        %985 = vmatprep.subr.bf16.mxu0 0
        %986 = vmatpush1.bf16.xpose.msra.mxu0 0
        %987 = vmatprep.subr.bf16.mxu0 0
        %988 = vmatpush1.bf16.xpose.msra.mxu0 0
        %989 = vmatprep.subr.bf16.mxu0 0
        %990 = vmatpush1.bf16.xpose.msra.mxu0 0
        %991 = vmatprep.subr.bf16.mxu0 0
        %992 = vmatpush1.bf16.xpose.msra.mxu0 0
        %993 = vmatprep.subr.bf16.mxu0 0
        %994 = vmatpush1.bf16.xpose.msra.mxu0 0
        %995 = vmatprep.subr.bf16.mxu0 0
        %996 = vmatpush1.bf16.xpose.msra.mxu0 0
        %997 = vmatprep.subr.bf16.mxu0 0
        %998 = vmatpush1.bf16.xpose.msra.mxu0 0
        %999 = vmatprep.subr.bf16.mxu0 0
        %1000 = vmatpush1.bf16.xpose.msra.mxu0 0
        %1001 = vmatprep.subr.bf16.mxu0 0
        %1002 = vmatpush1.bf16.xpose.msra.mxu0 0
        %1003 = vmatprep.subr.bf16.mxu0 0
        %1004 = vmatpush1.bf16.xpose.msra.mxu0 0
        %1005 = vmatprep.subr.bf16.mxu0 0
        %1006 = vmatpush1.bf16.xpose.msra.mxu0 0
        %1007 = vmatprep.subr.bf16.mxu0 0
        %1008 = vmatpush1.bf16.xpose.msra.mxu0 0
        %1009 = vmatprep.subr.bf16.mxu0 0
        %1010 = vmatpush1.bf16.xpose.msra.mxu0 0
        %1011 = vmatprep.mubr.bf16.mxu0 0
        %1012 = vmatmul.mubr.bf16.gmra.mrb[0].mxu0 %v974
        %v1013 = vpop.f32.mrb[0].mxu0
        %v1014 = vadd.f32 %v615, %v1013
        %v1015 = vpop.f32.mrb[0].mxu0
        %v1016 = vpop.f32.mrb[0].mxu0
        %v1017 = vpop.f32.mrb[0].mxu0
        %1018 = vdwg.mxu0
        %v1019 = vsel %vm619, %v1014, -inf
        %1020 = vmax.xlane.f32.xlu0 %v1019
        %v1021 = vpop.xlane.xlu0 %1020
        %v1022 = vsub.f32 %v1014, %v1021
        %v1023 = vmul.f32 %v1022, 1.442695
        %v1024 = vpow.pop %v1023
        %v1025 = vsel %vm619, %v1024, 0.0
        %1026 = vadd.xlane.f32.xlu0 %v1025
        %v1027 = vpop.xlane.xlu0 %1026
        %v1028 = vrcp.pop %v1027
        %v1029 = vmul.f32 %v1024, %v1028
        %v1030 = vpack.c.bf16 %v1029, %v1029
        %v1032 = vsel %vm619, %v1030, 0
        %v1035 = vsel %vm681, %v970, 0
        %1037 = vmatprep.subr.bf16.mxu0 0
        %1038 = vmatpush1.bf16.msra.mxu0 %v1035
        %1039 = vmatprep.subr.bf16.mxu0 0
        %1040 = vmatpush1.bf16.msra.mxu0 0
        %1041 = vmatprep.subr.bf16.mxu0 0
        %1042 = vmatpush1.bf16.msra.mxu0 0
        %1043 = vmatprep.subr.bf16.mxu0 0
        %1044 = vmatpush1.bf16.msra.mxu0 0
        %1045 = vmatprep.subr.bf16.mxu0 0
        %1046 = vmatpush1.bf16.msra.mxu0 0
        %1047 = vmatprep.subr.bf16.mxu0 0
        %1048 = vmatpush1.bf16.msra.mxu0 0
        %1049 = vmatprep.subr.bf16.mxu0 0
        %1050 = vmatpush1.bf16.msra.mxu0 0
        %1051 = vmatprep.subr.bf16.mxu0 0
        %1052 = vmatpush1.bf16.msra.mxu0 0
        %1053 = vmatprep.subr.bf16.mxu0 0
        %1054 = vmatpush1.bf16.msra.mxu0 0
        %1055 = vmatprep.subr.bf16.mxu0 0
        %1056 = vmatpush1.bf16.msra.mxu0 0
        %1057 = vmatprep.subr.bf16.mxu0 0
        %1058 = vmatpush1.bf16.msra.mxu0 0
        %1059 = vmatprep.subr.bf16.mxu0 0
        %1060 = vmatpush1.bf16.msra.mxu0 0
        %1061 = vmatprep.subr.bf16.mxu0 0
        %1062 = vmatpush1.bf16.msra.mxu0 0
        %1063 = vmatprep.subr.bf16.mxu0 0
        %1064 = vmatpush1.bf16.msra.mxu0 0
        %1065 = vmatprep.subr.bf16.mxu0 0
        %1066 = vmatpush1.bf16.msra.mxu0 0
        %1067 = vmatprep.subr.bf16.mxu0 0
        %1068 = vmatpush1.bf16.msra.mxu0 0
        %1069 = vmatprep.mubr.bf16.mxu0 0
        %1070 = vmatmul.mubr.bf16.gmra.mrb[0].mxu0 %v1032
        %v1071 = vpop.f32.mrb[0].mxu0
        %v1072 = vadd.f32 0.0, %v1071
        %v1073 = vpop.f32.mrb[0].mxu0
        %v1074 = vpop.f32.mrb[0].mxu0
        %v1075 = vpop.f32.mrb[0].mxu0
        %1076 = vdwg.mxu0
        %v1077 = vpack.c.bf16 %v1072, %v1072
        %v1079 = vunpack.c.l.b16 %v1077
        %v1080 = vpack.c.b16 %v1079, %v1079
        %1081 = vrot.lane.b32.xlu0 %v1080, 24
        %v1082 = vpop.permute.xlu0 %1081
        %vm1084 = vcmask 257216
        %1085 = vst.msk [vmem:[#allocation4] sm:$0xf] %vm1084, %v1082
        %v1086 = vld [vmem:[#allocation4] sm:$0xf]
        %v1087 = vld [vmem:[%s6] sm:$0xf]
        %v1088 = vld [vmem:[%s6 + $0x4] sm:$0xf]
        %v1089 = vld [vmem:[%s6 + $0x8] sm:$0xf]
        %v1090 = vld [vmem:[%s6 + $0xc] sm:$0xf]
        %v1091 = vld [vmem:[%s7] sm:$0x1]
        %v1093 = vlaneseq
        %v1094 = vshrl.u32 %v1093, 7
        %v1095 = vsub.s32 0, %v1094
        %v1096 = vrot.slane %v1091, %v1095
        %v1102 = vunpack.c.l.b16 %v1087
        %v1103 = vunpack.c.l.b16 %v1088
        %v1104 = vunpack.c.l.b16 %v1089
        %v1105 = vunpack.c.l.b16 %v1090
        %v1106 = vpack.c.b16 %v1103, %v1102
        %v1107 = vpack.c.b16 %v1105, %v1104
        %v1111 = vsel %vm565, %v1086, 0
        %1113 = vmatprep.subr.bf16.mxu0 0
        %1114 = vmatpush1.bf16.msra.mxu0 %v1106
        %1115 = vmatprep.subr.bf16.mxu0 0
        %1116 = vmatpush1.bf16.msra.mxu0 %v1107
        %1117 = vmatprep.subr.bf16.mxu0 0
        %1118 = vmatpush1.bf16.msra.mxu0 0
        %1119 = vmatprep.subr.bf16.mxu0 0
        %1120 = vmatpush1.bf16.msra.mxu0 0
        %1121 = vmatprep.subr.bf16.mxu0 0
        %1122 = vmatpush1.bf16.msra.mxu0 0
        %1123 = vmatprep.subr.bf16.mxu0 0
        %1124 = vmatpush1.bf16.msra.mxu0 0
        %1125 = vmatprep.subr.bf16.mxu0 0
        %1126 = vmatpush1.bf16.msra.mxu0 0
        %1127 = vmatprep.subr.bf16.mxu0 0
        %1128 = vmatpush1.bf16.msra.mxu0 0
        %1129 = vmatprep.subr.bf16.mxu0 0
        %1130 = vmatpush1.bf16.msra.mxu0 0
        %1131 = vmatprep.subr.bf16.mxu0 0
        %1132 = vmatpush1.bf16.msra.mxu0 0
        %1133 = vmatprep.subr.bf16.mxu0 0
        %1134 = vmatpush1.bf16.msra.mxu0 0
        %1135 = vmatprep.subr.bf16.mxu0 0
        %1136 = vmatpush1.bf16.msra.mxu0 0
        %1137 = vmatprep.subr.bf16.mxu0 0
        %1138 = vmatpush1.bf16.msra.mxu0 0
        %1139 = vmatprep.subr.bf16.mxu0 0
        %1140 = vmatpush1.bf16.msra.mxu0 0
        %1141 = vmatprep.subr.bf16.mxu0 0
        %1142 = vmatpush1.bf16.msra.mxu0 0
        %1143 = vmatprep.subr.bf16.mxu0 0
        %1144 = vmatpush1.bf16.msra.mxu0 0
        %1145 = vmatprep.mubr.bf16.mxu0 0
        %1146 = vmatmul.mubr.bf16.gmra.mrb[0].mxu0 %v1111
        %v1147 = vpop.f32.mrb[0].mxu0
        %v1148 = vadd.f32 %v1096, %v1147
        %v1149 = vpop.f32.mrb[0].mxu0
        %v1150 = vpop.f32.mrb[0].mxu0
        %v1151 = vpop.f32.mrb[0].mxu0
        %1152 = vdwg.mxu0
        %1153 = vst.msk [vmem:[%s424] sm:$0xff] %vm565, %v1148
        %s1154 = sand.u32 %s256, 1
        %s1155 = scalar_lea.sflag [#allocation7], %s1154
        %s1156 = sand.u32 %s256, 1
        %s1157 = smul.addr %s1156, 8
        %s1158 = scalar_lea.vmem [#allocation13], %s1157
        // Predicated region
        $region77: #{tpu_custom_call.1} parent=55 // pred_check
          %p1159 = pneg %p266
        $region78: #{tpu_custom_call.1} parent=55 // pred_check_branch
          %1161 = sbr.rel (%p1159) target = $region80
        $region79: #{tpu_custom_call.1} parent=55 // pred_region
          %s1163 = ssub.s32 128, 128
          %1164 = vsyncadd %s1155, %s1163
          %s1165 = sadd.s32 %s33, %s32
          %s1166 = smul.addr %s1165, 128
          %s1167 = scalar_lea.hbm %s9, %s1166
          %s1169 = sshll.u32 %s1158, 4
          %s1170 = int_to_ptr.vmem [resolvable:$true] %s1169
          %1172 = dma.vmem_to_hbm [thread:$0]  %s1170, 128, %s1167, %s1155
        $region80: #{tpu_custom_call.1} parent=55 // pred_fallthru
          _
      $region56: #{tpu_custom_call.1} parent=5 // pred_fallthru
        _
      %p1173 = scmp.le.s32.totalorder 2, %s23
      // Predicated region
      $region81: #{tpu_custom_call.1} parent=5 // pred_check
        %p1174 = pneg %p1173
      $region82: #{tpu_custom_call.1} parent=5 // pred_check_branch
        %1176 = sbr.rel (%p1174) target = $region84
      $region83: #{tpu_custom_call.1} parent=5 // pred_region
        %s1177 = ssub.s32 %s23, 2
        // Predicated region
        $region85: #{tpu_custom_call.1} parent=83 // pred_check
          %p1178 = pneg %p272
        $region86: #{tpu_custom_call.1} parent=83 // pred_check_branch
          %1180 = sbr.rel (%p1178) target = $region88
        $region87: #{tpu_custom_call.1} parent=83 // pred_region
          %s1181 = sand.u32 %s257, 1
          %s1182 = scalar_lea.sflag [#allocation7], %s1181
          %s1183 = sand.u32 %s257, 1
          %s1184 = smul.addr %s1183, 8
          %s1185 = scalar_lea.vmem [#allocation13], %s1184
          %1186 = dma.done %s1182, 128
        $region88: #{tpu_custom_call.1} parent=83 // pred_fallthru
          _
      $region84: #{tpu_custom_call.1} parent=5 // pred_fallthru
        _
    $region6: #{tpu_custom_call.1} parent=1 // loop_footer
      %s27 = sadd.s32 1, %s23
    $region7: #{tpu_custom_call.1} parent=1 // loop_footer_branch
      %22 = sbr.rel target = $region3
    $region8: #{tpu_custom_call.1} parent=1 // loop_exit
      _
    %1187 = vsyncpa [#allocation6], 1
    %s1188 = scalar_lea.sflag [#allocation6], 1
    %1189 = vsyncpa %s1188, 1
    %1190 = vsyncpa [#allocation9], 1
    %1191 = vsyncpa [#allocation12], 1
    %1192 = vsyncpa [#allocation7], 1
    %s1193 = scalar_lea.sflag [#allocation7], 1
    %1194 = vsyncpa %s1193, 1

</llo_original>
